<compile_context>
chip_gen: v7x
topology: tpu7x:2x2x1
jax: 0.10.0
libtpu: 0.0.40
codegen_flags: <defaults>
</compile_context>

<pallas_src>
import functools

import numpy as np
import jax
import jax.numpy as jnp
from jax.experimental import pallas as pl
from jax.experimental.pallas import tpu as pltpu


# ----------------------------------------------------------------------------
# helpers (mirror the PyTorch module's channel arithmetic / activations)
# ----------------------------------------------------------------------------
def _make_divisible(ch, divisor=8, min_ch=None):
    if min_ch is None:
        min_ch = divisor
    new_ch = max(min_ch, int(ch + divisor / 2) // divisor * divisor)
    if new_ch < 0.9 * ch:
        new_ch += divisor
    return new_ch


def _hardswish(x):
    return x * jnp.clip(x + 3.0, 0.0, 6.0) * (1.0 / 6.0)


def _make_tap_masks(H, W, K):
    """(K*K, 1, H*W) float32 validity masks for the zero-padded depthwise taps."""
    pad = (K - 1) // 2
    hh, ww = np.meshgrid(np.arange(H), np.arange(W), indexing="ij")
    taps = []
    for dh in range(K):
        for dw in range(K):
            ok = ((hh + dh - pad >= 0) & (hh + dh - pad < H) &
                  (ww + dw - pad >= 0) & (ww + dw - pad < W))
            taps.append(ok.reshape(1, H * W))
    return jnp.asarray(np.stack(taps).astype(np.float32))


# ----------------------------------------------------------------------------
# Fused Pallas kernel: expand -> depthwise -> SE -> project+residual
# ----------------------------------------------------------------------------
def _fused_ir_kernel(x_ref, mask_ref, w_exp_ref, b_exp_ref, w_dw_ref, b_dw_ref,
                     w_se1_ref, b_se1_ref, w_se2_ref, b_se2_ref,
                     w_proj_ref, b_proj_ref, o_ref, ypad_ref,
                     *, H, W, K, pad_lanes):
    HW = H * W
    pad = (K - 1) // 2

    x = x_ref[0]                                                    # (Cin, HW)

    # ---- 1) expand 1x1 conv + folded BN + Hardswish (channel-first matmul) ----
    y = jnp.dot(w_exp_ref[...], x, preferred_element_type=jnp.float32)
    y = _hardswish(y + b_exp_ref[...])                              # (Cexp, HW)

    # ---- 2) depthwise KxK conv (stride 1) + folded BN + Hardswish -------------
    # Zero-padded flat row buffer in VMEM; each tap is a lane-shifted read whose
    # invalid (row/col out-of-range) positions are killed by a precomputed mask.
    ypad_ref[...] = jnp.zeros(ypad_ref.shape, ypad_ref.dtype)
    ypad_ref[:, pad_lanes:pad_lanes + HW] = y

    acc = jnp.zeros(y.shape, jnp.float32)
    for dh in range(K):
        for dw in range(K):
            t = dh * K + dw
            off = (dh - pad) * W + (dw - pad)
            shifted = ypad_ref[:, pad_lanes + off:pad_lanes + off + HW]  # (Cexp, HW)
            acc = acc + shifted * mask_ref[t] * w_dw_ref[t]
    z = _hardswish(acc + b_dw_ref[...])                             # (Cexp, HW)

    # ---- 3) Squeeze-Excitation: pool -> fc1+relu -> fc2+hardsigmoid -> scale ---
    pooled = jnp.sum(z, axis=1, keepdims=True) * (1.0 / float(HW))  # (Cexp, 1)
    s = jnp.sum(w_se1_ref[...] * pooled, axis=0, keepdims=True) + b_se1_ref[...]  # (1, Csq)
    s = jnp.maximum(s, 0.0)                                         # relu
    s = jnp.sum(w_se2_ref[...] * s, axis=1, keepdims=True) + b_se2_ref[...]       # (Cexp, 1)
    s = jnp.clip(s * (1.0 / 6.0) + 0.5, 0.0, 1.0)                   # hardsigmoid
    z = z * s

    # ---- 4) project 1x1 conv + folded BN (identity act) + residual add --------
    out = jnp.dot(w_proj_ref[...], z, preferred_element_type=jnp.float32)
    o_ref[0] = (out + b_proj_ref[...] + x).astype(o_ref.dtype)


# ----------------------------------------------------------------------------
# Wrapper: full InvertedResidual forward (NCHW in / NCHW out, reshape only)
# ----------------------------------------------------------------------------
@functools.partial(jax.jit, static_argnames=("kernel",))
def inverted_residual_forward(x_nchw, params, *, kernel=3):
    """x_nchw: (N, Cin, H, W) float32.  Returns (N, Cout, H, W)."""
    N, Cin, H, W = x_nchw.shape
    Cexp = params["w_expand"].shape[0]
    Cout = params["w_project"].shape[0]
    Csq = params["w_se1"].shape[1]
    K = kernel
    HW = H * W
    pad = (K - 1) // 2

    assert Cin == Cout, "residual branch requires input_c == out_c"
    # TODO(synk): stride=2 (no-residual) depthwise variant not implemented (config uses stride=1).

    max_shift = pad * W + pad                     # largest |lane shift| among the taps
    pad_lanes = ((max_shift + 127) // 128) * 128  # keep the interior write vreg-aligned

    x = x_nchw.reshape(N, Cin, HW).astype(jnp.float32)  # free reshape, no transpose
    masks = _make_tap_masks(H, W, K)                    # (K*K, 1, HW) constants

    kern = functools.partial(_fused_ir_kernel, H=H, W=W, K=K, pad_lanes=pad_lanes)

    out = pl.pallas_call(
        kern,
        out_shape=jax.ShapeDtypeStruct((N, Cout, HW), jnp.float32),
        grid=(N,),
        in_specs=[
            pl.BlockSpec((1, Cin, HW), lambda n: (n, 0, 0)),       # x (per batch)
            pl.BlockSpec((K * K, 1, HW), lambda n: (0, 0, 0)),     # tap validity masks
            pl.BlockSpec((Cexp, Cin), lambda n: (0, 0)),           # w_expand (folded BN)
            pl.BlockSpec((Cexp, 1), lambda n: (0, 0)),             # b_expand
            pl.BlockSpec((K * K, Cexp, 1), lambda n: (0, 0, 0)),   # w_dw (tap-major)
            pl.BlockSpec((Cexp, 1), lambda n: (0, 0)),             # b_dw
            pl.BlockSpec((Cexp, Csq), lambda n: (0, 0)),           # w_se1 (fc1^T)
            pl.BlockSpec((1, Csq), lambda n: (0, 0)),              # b_se1
            pl.BlockSpec((Cexp, Csq), lambda n: (0, 0)),           # w_se2 (fc2)
            pl.BlockSpec((Cexp, 1), lambda n: (0, 0)),             # b_se2
            pl.BlockSpec((Cout, Cexp), lambda n: (0, 0)),          # w_project (folded BN)
            pl.BlockSpec((Cout, 1), lambda n: (0, 0)),             # b_project
        ],
        out_specs=pl.BlockSpec((1, Cout, HW), lambda n: (n, 0, 0)),
        scratch_shapes=[pltpu.VMEM((Cexp, HW + 2 * pad_lanes), jnp.float32)],
        compiler_params=pltpu.CompilerParams(
            dimension_semantics=("parallel",),
            vmem_limit_bytes=32 * 1024 * 1024,
        ),
    )(x, masks,
      params["w_expand"], params["b_expand"],
      params["w_dw"], params["b_dw"],
      params["w_se1"], params["b_se1"],
      params["w_se2"], params["b_se2"],
      params["w_project"], params["b_project"])

    return out.reshape(N, Cout, H, W)


# ----------------------------------------------------------------------------
# Deterministic parameter construction (eval-mode BN folded into conv weights)
# ----------------------------------------------------------------------------
def make_params(key, Cin, Cexp, Cout, kernel, eps=1e-5):
    Csq = _make_divisible(Cexp // 4, 8)
    ks = jax.random.split(key, 13)

    def bn_fold(kw, kb, C):
        gamma = 1.0 + 0.1 * jax.random.normal(kw, (C,), jnp.float32)
        beta = 0.1 * jax.random.normal(kb, (C,), jnp.float32)
        # running_mean=0, running_var=1 (PyTorch defaults, eval mode)
        scale = gamma / jnp.sqrt(1.0 + eps)
        return scale, beta

    # expand 1x1: torch weight (Cexp, Cin, 1, 1) -> (Cexp, Cin), channel-first
    w_e = 0.1 * jax.random.normal(ks[0], (Cexp, Cin), jnp.float32)
    s_e, b_e = bn_fold(ks[1], ks[2], Cexp)
    w_expand = w_e * s_e[:, None]
    b_expand = b_e.reshape(Cexp, 1)

    # depthwise KxK: torch weight (Cexp, 1, K, K) -> tap-major (K*K, Cexp, 1)
    w_d = 0.1 * jax.random.normal(ks[3], (Cexp, kernel * kernel), jnp.float32)
    s_d, b_d = bn_fold(ks[4], ks[5], Cexp)
    w_dw = (w_d * s_d[:, None]).T.reshape(kernel * kernel, Cexp, 1)
    b_dw = b_d.reshape(Cexp, 1)

    # SE fc1: torch (Csq, Cexp, 1, 1) -> stored transposed (Cexp, Csq)
    # SE fc2: torch (Cexp, Csq, 1, 1) -> stored natural    (Cexp, Csq)
    w_se1 = 0.1 * jax.random.normal(ks[6], (Cexp, Csq), jnp.float32)
    b_se1 = 0.1 * jax.random.normal(ks[7], (1, Csq), jnp.float32)
    w_se2 = 0.1 * jax.random.normal(ks[8], (Cexp, Csq), jnp.float32)
    b_se2 = 0.1 * jax.random.normal(ks[9], (Cexp, 1), jnp.float32)

    # project 1x1: torch weight (Cout, Cexp, 1, 1) -> (Cout, Cexp)
    w_p = 0.1 * jax.random.normal(ks[10], (Cout, Cexp), jnp.float32)
    s_p, b_p = bn_fold(ks[11], ks[12], Cout)
    w_project = w_p * s_p[:, None]
    b_project = b_p.reshape(Cout, 1)

    return dict(w_expand=w_expand, b_expand=b_expand,
                w_dw=w_dw, b_dw=b_dw,
                w_se1=w_se1, b_se1=b_se1, w_se2=w_se2, b_se2=b_se2,
                w_project=w_project, b_project=b_project)


if __name__ == "__main__":
    # InvertedResidualConfig(16, 3, 32, 16, use_se=True, 'HS', stride=1, width_multi=1.0)
    Cin = _make_divisible(16 * 1.0, 8)   # 16
    Cexp = _make_divisible(32 * 1.0, 8)  # 32
    Cout = _make_divisible(16 * 1.0, 8)  # 16
    kernel = 3
    N, H, W = 2, 16, 16

    key = jax.random.PRNGKey(0)
    kx, kp = jax.random.split(key)
    x = jax.random.normal(kx, (N, Cin, H, W), jnp.float32)  # NCHW like PyTorch
    params = make_params(kp, Cin, Cexp, Cout, kernel)

    out = inverted_residual_forward(x, params, kernel=kernel)
    out = jax.block_until_ready(out)

    assert out.shape == (N, Cout, H, W), out.shape
    assert bool(jnp.all(jnp.isfinite(out)))
    print("KERNEL_OK")
</pallas_src>

<mosaic_0001>
module attributes {stable_mosaic.version = 11 : i64} {
  func.func @_fused_ir_kernel(%arg0: i32, %arg1: memref<1x16x256xf32, #tpu.memory_space<vmem>>, %arg2: memref<9x1x256xf32, #tpu.memory_space<vmem>>, %arg3: memref<32x16xf32, #tpu.memory_space<vmem>>, %arg4: memref<32x1xf32, #tpu.memory_space<vmem>>, %arg5: memref<9x32x1xf32, #tpu.memory_space<vmem>>, %arg6: memref<32x1xf32, #tpu.memory_space<vmem>>, %arg7: memref<32x8xf32, #tpu.memory_space<vmem>>, %arg8: memref<1x8xf32, #tpu.memory_space<vmem>>, %arg9: memref<32x8xf32, #tpu.memory_space<vmem>>, %arg10: memref<32x1xf32, #tpu.memory_space<vmem>>, %arg11: memref<16x32xf32, #tpu.memory_space<vmem>>, %arg12: memref<16x1xf32, #tpu.memory_space<vmem>>, %arg13: memref<1x16x256xf32, #tpu.memory_space<vmem>>, %arg14: memref<32x512xf32, #tpu.memory_space<vmem>>) attributes {dimension_semantics = [#tpu.dimension_semantics<parallel>], iteration_bounds = array<i64: 2>, scalar_prefetch = 0 : i64, scratch_operands = 1 : i64, tpu.core_type = #tpu.core_type<tc>, window_params = [{transform_indices = @transform_0, window_bounds = array<i64: 1, 16, 256>}, {pipeline_mode = #tpu.pipeline_mode<synchronous>, transform_indices = @transform_1, window_bounds = array<i64: 9, 1, 256>}, {pipeline_mode = #tpu.pipeline_mode<synchronous>, transform_indices = @transform_2, window_bounds = array<i64: 32, 16>}, {pipeline_mode = #tpu.pipeline_mode<synchronous>, transform_indices = @transform_3, window_bounds = array<i64: 32, 1>}, {pipeline_mode = #tpu.pipeline_mode<synchronous>, transform_indices = @transform_4, window_bounds = array<i64: 9, 32, 1>}, {pipeline_mode = #tpu.pipeline_mode<synchronous>, transform_indices = @transform_5, window_bounds = array<i64: 32, 1>}, {pipeline_mode = #tpu.pipeline_mode<synchronous>, transform_indices = @transform_6, window_bounds = array<i64: 32, 8>}, {pipeline_mode = #tpu.pipeline_mode<synchronous>, transform_indices = @transform_7, window_bounds = array<i64: 1, 8>}, {pipeline_mode = #tpu.pipeline_mode<synchronous>, transform_indices = @transform_8, window_bounds = array<i64: 32, 8>}, {pipeline_mode = #tpu.pipeline_mode<synchronous>, transform_indices = @transform_9, window_bounds = array<i64: 32, 1>}, {pipeline_mode = #tpu.pipeline_mode<synchronous>, transform_indices = @transform_10, window_bounds = array<i64: 16, 32>}, {pipeline_mode = #tpu.pipeline_mode<synchronous>, transform_indices = @transform_11, window_bounds = array<i64: 16, 1>}, {transform_indices = @transform_12, window_bounds = array<i64: 1, 16, 256>}]} {
    %c0 = arith.constant 0 : index
    %c0_0 = arith.constant 0 : index
    %c0_1 = arith.constant 0 : index
    %0 = vector.load %arg1[%c0, %c0_0, %c0_1] : memref<1x16x256xf32, #tpu.memory_space<vmem>>, vector<1x16x256xf32>
    %1 = vector.shape_cast %0 : vector<1x16x256xf32> to vector<16x256xf32>
    %c0_2 = arith.constant 0 : index
    %c0_3 = arith.constant 0 : index
    %2 = vector.load %arg3[%c0_2, %c0_3] : memref<32x16xf32, #tpu.memory_space<vmem>>, vector<32x16xf32>
    %cst = arith.constant dense<0.000000e+00> : vector<32x256xf32>
    %3 = tpu.matmul %2, %1, %cst {dimension_numbers = #tpu.dot_dimension_numbers<[1], [0], [0], [1], [0, 0, 1, 1], [], []>} : vector<32x16xf32>, vector<16x256xf32>, vector<32x256xf32> -> vector<32x256xf32>
    %c0_4 = arith.constant 0 : index
    %c0_5 = arith.constant 0 : index
    %4 = vector.load %arg4[%c0_4, %c0_5] : memref<32x1xf32, #tpu.memory_space<vmem>>, vector<32x1xf32>
    %5 = vector.broadcast %4 : vector<32x1xf32> to vector<32x256xf32>
    %6 = arith.addf %3, %5 : vector<32x256xf32>
    %cst_6 = arith.constant 3.000000e+00 : f32
    %7 = vector.broadcast %cst_6 : f32 to vector<32x256xf32>
    %8 = arith.addf %6, %7 : vector<32x256xf32>
    %cst_7 = arith.constant 0.000000e+00 : f32
    %cst_8 = arith.constant 6.000000e+00 : f32
    %9 = vector.broadcast %cst_7 : f32 to vector<32x256xf32>
    %10 = arith.maximumf %9, %8 : vector<32x256xf32>
    %11 = vector.broadcast %cst_8 : f32 to vector<32x256xf32>
    %12 = arith.minimumf %11, %10 : vector<32x256xf32>
    %13 = arith.mulf %6, %12 : vector<32x256xf32>
    %cst_9 = arith.constant 0.166666672 : f32
    %14 = vector.broadcast %cst_9 : f32 to vector<32x256xf32>
    %15 = arith.mulf %13, %14 : vector<32x256xf32>
    %cst_10 = arith.constant 0.000000e+00 : f32
    %16 = vector.broadcast %cst_10 : f32 to vector<32x512xf32>
    %c0_11 = arith.constant 0 : index
    %c0_12 = arith.constant 0 : index
    %17 = vector.load %arg14[%c0_11, %c0_12] : memref<32x512xf32, #tpu.memory_space<vmem>>, vector<32x512xf32>
    tpu.vector_store %arg14[%c0_11, %c0_12], %16 {strides = array<i32>} : memref<32x512xf32, #tpu.memory_space<vmem>>, vector<32x512xf32>,
    %c0_13 = arith.constant 0 : index
    %c128 = arith.constant 128 : index
    %18 = vector.load %arg14[%c0_13, %c128] : memref<32x512xf32, #tpu.memory_space<vmem>>, vector<32x256xf32>
    tpu.vector_store %arg14[%c0_13, %c128], %15 {strides = array<i32>} : memref<32x512xf32, #tpu.memory_space<vmem>>, vector<32x256xf32>,
    %cst_14 = arith.constant 0.000000e+00 : f32
    %19 = vector.broadcast %cst_14 : f32 to vector<32x256xf32>
    %c0_15 = arith.constant 0 : index
    %c111 = arith.constant 111 : index
    %20 = vector.load %arg14[%c0_15, %c111] : memref<32x512xf32, #tpu.memory_space<vmem>>, vector<32x256xf32>
    %c0_16 = arith.constant 0 : index
    %c0_17 = arith.constant 0 : index
    %c0_18 = arith.constant 0 : index
    %21 = vector.load %arg2[%c0_16, %c0_17, %c0_18] : memref<9x1x256xf32, #tpu.memory_space<vmem>>, vector<1x1x256xf32>
    %22 = vector.shape_cast %21 : vector<1x1x256xf32> to vector<1x256xf32>
    %23 = vector.broadcast %22 : vector<1x256xf32> to vector<32x256xf32>
    %24 = arith.mulf %20, %23 : vector<32x256xf32>
    %c0_19 = arith.constant 0 : index
    %c0_20 = arith.constant 0 : index
    %c0_21 = arith.constant 0 : index
    %25 = vector.load %arg5[%c0_19, %c0_20, %c0_21] : memref<9x32x1xf32, #tpu.memory_space<vmem>>, vector<1x32x1xf32>
    %26 = vector.shape_cast %25 : vector<1x32x1xf32> to vector<32x1xf32>
    %27 = vector.broadcast %26 : vector<32x1xf32> to vector<32x256xf32>
    %28 = arith.mulf %24, %27 : vector<32x256xf32>
    %29 = arith.addf %19, %28 : vector<32x256xf32>
    %c0_22 = arith.constant 0 : index
    %c112 = arith.constant 112 : index
    %30 = vector.load %arg14[%c0_22, %c112] : memref<32x512xf32, #tpu.memory_space<vmem>>, vector<32x256xf32>
    %c1 = arith.constant 1 : index
    %c0_23 = arith.constant 0 : index
    %c0_24 = arith.constant 0 : index
    %31 = vector.load %arg2[%c1, %c0_23, %c0_24] : memref<9x1x256xf32, #tpu.memory_space<vmem>>, vector<1x1x256xf32>
    %32 = vector.shape_cast %31 : vector<1x1x256xf32> to vector<1x256xf32>
    %33 = vector.broadcast %32 : vector<1x256xf32> to vector<32x256xf32>
    %34 = arith.mulf %30, %33 : vector<32x256xf32>
    %c1_25 = arith.constant 1 : index
    %c0_26 = arith.constant 0 : index
    %c0_27 = arith.constant 0 : index
    %35 = vector.load %arg5[%c1_25, %c0_26, %c0_27] : memref<9x32x1xf32, #tpu.memory_space<vmem>>, vector<1x32x1xf32>
    %36 = vector.shape_cast %35 : vector<1x32x1xf32> to vector<32x1xf32>
    %37 = vector.broadcast %36 : vector<32x1xf32> to vector<32x256xf32>
    %38 = arith.mulf %34, %37 : vector<32x256xf32>
    %39 = arith.addf %29, %38 : vector<32x256xf32>
    %c0_28 = arith.constant 0 : index
    %c113 = arith.constant 113 : index
    %40 = vector.load %arg14[%c0_28, %c113] : memref<32x512xf32, #tpu.memory_space<vmem>>, vector<32x256xf32>
    %c2 = arith.constant 2 : index
    %c0_29 = arith.constant 0 : index
    %c0_30 = arith.constant 0 : index
    %41 = vector.load %arg2[%c2, %c0_29, %c0_30] : memref<9x1x256xf32, #tpu.memory_space<vmem>>, vector<1x1x256xf32>
    %42 = vector.shape_cast %41 : vector<1x1x256xf32> to vector<1x256xf32>
    %43 = vector.broadcast %42 : vector<1x256xf32> to vector<32x256xf32>
    %44 = arith.mulf %40, %43 : vector<32x256xf32>
    %c2_31 = arith.constant 2 : index
    %c0_32 = arith.constant 0 : index
    %c0_33 = arith.constant 0 : index
    %45 = vector.load %arg5[%c2_31, %c0_32, %c0_33] : memref<9x32x1xf32, #tpu.memory_space<vmem>>, vector<1x32x1xf32>
    %46 = vector.shape_cast %45 : vector<1x32x1xf32> to vector<32x1xf32>
    %47 = vector.broadcast %46 : vector<32x1xf32> to vector<32x256xf32>
    %48 = arith.mulf %44, %47 : vector<32x256xf32>
    %49 = arith.addf %39, %48 : vector<32x256xf32>
    %c0_34 = arith.constant 0 : index
    %c127 = arith.constant 127 : index
    %50 = vector.load %arg14[%c0_34, %c127] : memref<32x512xf32, #tpu.memory_space<vmem>>, vector<32x256xf32>
    %c3 = arith.constant 3 : index
    %c0_35 = arith.constant 0 : index
    %c0_36 = arith.constant 0 : index
    %51 = vector.load %arg2[%c3, %c0_35, %c0_36] : memref<9x1x256xf32, #tpu.memory_space<vmem>>, vector<1x1x256xf32>
    %52 = vector.shape_cast %51 : vector<1x1x256xf32> to vector<1x256xf32>
    %53 = vector.broadcast %52 : vector<1x256xf32> to vector<32x256xf32>
    %54 = arith.mulf %50, %53 : vector<32x256xf32>
    %c3_37 = arith.constant 3 : index
    %c0_38 = arith.constant 0 : index
    %c0_39 = arith.constant 0 : index
    %55 = vector.load %arg5[%c3_37, %c0_38, %c0_39] : memref<9x32x1xf32, #tpu.memory_space<vmem>>, vector<1x32x1xf32>
    %56 = vector.shape_cast %55 : vector<1x32x1xf32> to vector<32x1xf32>
    %57 = vector.broadcast %56 : vector<32x1xf32> to vector<32x256xf32>
    %58 = arith.mulf %54, %57 : vector<32x256xf32>
    %59 = arith.addf %49, %58 : vector<32x256xf32>
    %c0_40 = arith.constant 0 : index
    %c128_41 = arith.constant 128 : index
    %60 = vector.load %arg14[%c0_40, %c128_41] : memref<32x512xf32, #tpu.memory_space<vmem>>, vector<32x256xf32>
    %c4 = arith.constant 4 : index
    %c0_42 = arith.constant 0 : index
    %c0_43 = arith.constant 0 : index
    %61 = vector.load %arg2[%c4, %c0_42, %c0_43] : memref<9x1x256xf32, #tpu.memory_space<vmem>>, vector<1x1x256xf32>
    %62 = vector.shape_cast %61 : vector<1x1x256xf32> to vector<1x256xf32>
    %63 = vector.broadcast %62 : vector<1x256xf32> to vector<32x256xf32>
    %64 = arith.mulf %60, %63 : vector<32x256xf32>
    %c4_44 = arith.constant 4 : index
    %c0_45 = arith.constant 0 : index
    %c0_46 = arith.constant 0 : index
    %65 = vector.load %arg5[%c4_44, %c0_45, %c0_46] : memref<9x32x1xf32, #tpu.memory_space<vmem>>, vector<1x32x1xf32>
    %66 = vector.shape_cast %65 : vector<1x32x1xf32> to vector<32x1xf32>
    %67 = vector.broadcast %66 : vector<32x1xf32> to vector<32x256xf32>
    %68 = arith.mulf %64, %67 : vector<32x256xf32>
    %69 = arith.addf %59, %68 : vector<32x256xf32>
    %c0_47 = arith.constant 0 : index
    %c129 = arith.constant 129 : index
    %70 = vector.load %arg14[%c0_47, %c129] : memref<32x512xf32, #tpu.memory_space<vmem>>, vector<32x256xf32>
    %c5 = arith.constant 5 : index
    %c0_48 = arith.constant 0 : index
    %c0_49 = arith.constant 0 : index
    %71 = vector.load %arg2[%c5, %c0_48, %c0_49] : memref<9x1x256xf32, #tpu.memory_space<vmem>>, vector<1x1x256xf32>
    %72 = vector.shape_cast %71 : vector<1x1x256xf32> to vector<1x256xf32>
    %73 = vector.broadcast %72 : vector<1x256xf32> to vector<32x256xf32>
    %74 = arith.mulf %70, %73 : vector<32x256xf32>
    %c5_50 = arith.constant 5 : index
    %c0_51 = arith.constant 0 : index
    %c0_52 = arith.constant 0 : index
    %75 = vector.load %arg5[%c5_50, %c0_51, %c0_52] : memref<9x32x1xf32, #tpu.memory_space<vmem>>, vector<1x32x1xf32>
    %76 = vector.shape_cast %75 : vector<1x32x1xf32> to vector<32x1xf32>
    %77 = vector.broadcast %76 : vector<32x1xf32> to vector<32x256xf32>
    %78 = arith.mulf %74, %77 : vector<32x256xf32>
    %79 = arith.addf %69, %78 : vector<32x256xf32>
    %c0_53 = arith.constant 0 : index
    %c143 = arith.constant 143 : index
    %80 = vector.load %arg14[%c0_53, %c143] : memref<32x512xf32, #tpu.memory_space<vmem>>, vector<32x256xf32>
    %c6 = arith.constant 6 : index
    %c0_54 = arith.constant 0 : index
    %c0_55 = arith.constant 0 : index
    %81 = vector.load %arg2[%c6, %c0_54, %c0_55] : memref<9x1x256xf32, #tpu.memory_space<vmem>>, vector<1x1x256xf32>
    %82 = vector.shape_cast %81 : vector<1x1x256xf32> to vector<1x256xf32>
    %83 = vector.broadcast %82 : vector<1x256xf32> to vector<32x256xf32>
    %84 = arith.mulf %80, %83 : vector<32x256xf32>
    %c6_56 = arith.constant 6 : index
    %c0_57 = arith.constant 0 : index
    %c0_58 = arith.constant 0 : index
    %85 = vector.load %arg5[%c6_56, %c0_57, %c0_58] : memref<9x32x1xf32, #tpu.memory_space<vmem>>, vector<1x32x1xf32>
    %86 = vector.shape_cast %85 : vector<1x32x1xf32> to vector<32x1xf32>
    %87 = vector.broadcast %86 : vector<32x1xf32> to vector<32x256xf32>
    %88 = arith.mulf %84, %87 : vector<32x256xf32>
    %89 = arith.addf %79, %88 : vector<32x256xf32>
    %c0_59 = arith.constant 0 : index
    %c144 = arith.constant 144 : index
    %90 = vector.load %arg14[%c0_59, %c144] : memref<32x512xf32, #tpu.memory_space<vmem>>, vector<32x256xf32>
    %c7 = arith.constant 7 : index
    %c0_60 = arith.constant 0 : index
    %c0_61 = arith.constant 0 : index
    %91 = vector.load %arg2[%c7, %c0_60, %c0_61] : memref<9x1x256xf32, #tpu.memory_space<vmem>>, vector<1x1x256xf32>
    %92 = vector.shape_cast %91 : vector<1x1x256xf32> to vector<1x256xf32>
    %93 = vector.broadcast %92 : vector<1x256xf32> to vector<32x256xf32>
    %94 = arith.mulf %90, %93 : vector<32x256xf32>
    %c7_62 = arith.constant 7 : index
    %c0_63 = arith.constant 0 : index
    %c0_64 = arith.constant 0 : index
    %95 = vector.load %arg5[%c7_62, %c0_63, %c0_64] : memref<9x32x1xf32, #tpu.memory_space<vmem>>, vector<1x32x1xf32>
    %96 = vector.shape_cast %95 : vector<1x32x1xf32> to vector<32x1xf32>
    %97 = vector.broadcast %96 : vector<32x1xf32> to vector<32x256xf32>
    %98 = arith.mulf %94, %97 : vector<32x256xf32>
    %99 = arith.addf %89, %98 : vector<32x256xf32>
    %c0_65 = arith.constant 0 : index
    %c145 = arith.constant 145 : index
    %100 = vector.load %arg14[%c0_65, %c145] : memref<32x512xf32, #tpu.memory_space<vmem>>, vector<32x256xf32>
    %c8 = arith.constant 8 : index
    %c0_66 = arith.constant 0 : index
    %c0_67 = arith.constant 0 : index
    %101 = vector.load %arg2[%c8, %c0_66, %c0_67] : memref<9x1x256xf32, #tpu.memory_space<vmem>>, vector<1x1x256xf32>
    %102 = vector.shape_cast %101 : vector<1x1x256xf32> to vector<1x256xf32>
    %103 = vector.broadcast %102 : vector<1x256xf32> to vector<32x256xf32>
    %104 = arith.mulf %100, %103 : vector<32x256xf32>
    %c8_68 = arith.constant 8 : index
    %c0_69 = arith.constant 0 : index
    %c0_70 = arith.constant 0 : index
    %105 = vector.load %arg5[%c8_68, %c0_69, %c0_70] : memref<9x32x1xf32, #tpu.memory_space<vmem>>, vector<1x32x1xf32>
    %106 = vector.shape_cast %105 : vector<1x32x1xf32> to vector<32x1xf32>
    %107 = vector.broadcast %106 : vector<32x1xf32> to vector<32x256xf32>
    %108 = arith.mulf %104, %107 : vector<32x256xf32>
    %109 = arith.addf %99, %108 : vector<32x256xf32>
    %c0_71 = arith.constant 0 : index
    %c0_72 = arith.constant 0 : index
    %110 = vector.load %arg6[%c0_71, %c0_72] : memref<32x1xf32, #tpu.memory_space<vmem>>, vector<32x1xf32>
    %111 = vector.broadcast %110 : vector<32x1xf32> to vector<32x256xf32>
    %112 = arith.addf %109, %111 : vector<32x256xf32>
    %cst_73 = arith.constant 3.000000e+00 : f32
    %113 = vector.broadcast %cst_73 : f32 to vector<32x256xf32>
    %114 = arith.addf %112, %113 : vector<32x256xf32>
    %cst_74 = arith.constant 0.000000e+00 : f32
    %cst_75 = arith.constant 6.000000e+00 : f32
    %115 = vector.broadcast %cst_74 : f32 to vector<32x256xf32>
    %116 = arith.maximumf %115, %114 : vector<32x256xf32>
    %117 = vector.broadcast %cst_75 : f32 to vector<32x256xf32>
    %118 = arith.minimumf %117, %116 : vector<32x256xf32>
    %119 = arith.mulf %112, %118 : vector<32x256xf32>
    %cst_76 = arith.constant 0.166666672 : f32
    %120 = vector.broadcast %cst_76 : f32 to vector<32x256xf32>
    %121 = arith.mulf %119, %120 : vector<32x256xf32>
    %cst_77 = arith.constant dense<0.000000e+00> : vector<32xf32>
    %122 = vector.multi_reduction <add>, %121, %cst_77 [1] : vector<32x256xf32> to vector<32xf32>
    %123 = vector.shape_cast %122 : vector<32xf32> to vector<32x1xf32>
    %cst_78 = arith.constant 3.906250e-03 : f32
    %124 = vector.broadcast %cst_78 : f32 to vector<32x1xf32>
    %125 = arith.mulf %123, %124 : vector<32x1xf32>
    %c0_79 = arith.constant 0 : index
    %c0_80 = arith.constant 0 : index
    %126 = vector.load %arg7[%c0_79, %c0_80] : memref<32x8xf32, #tpu.memory_space<vmem>>, vector<32x8xf32>
    %127 = vector.broadcast %125 : vector<32x1xf32> to vector<32x8xf32>
    %128 = arith.mulf %126, %127 : vector<32x8xf32>
    %cst_81 = arith.constant dense<0.000000e+00> : vector<8xf32>
    %129 = vector.multi_reduction <add>, %128, %cst_81 [0] : vector<32x8xf32> to vector<8xf32>
    %130 = vector.shape_cast %129 : vector<8xf32> to vector<1x8xf32>
    %c0_82 = arith.constant 0 : index
    %c0_83 = arith.constant 0 : index
    %131 = vector.load %arg8[%c0_82, %c0_83] : memref<1x8xf32, #tpu.memory_space<vmem>>, vector<1x8xf32>
    %132 = arith.addf %130, %131 : vector<1x8xf32>
    %cst_84 = arith.constant 0.000000e+00 : f32
    %133 = vector.broadcast %cst_84 : f32 to vector<1x8xf32>
    %134 = arith.maximumf %132, %133 : vector<1x8xf32>
    %c0_85 = arith.constant 0 : index
    %c0_86 = arith.constant 0 : index
    %135 = vector.load %arg9[%c0_85, %c0_86] : memref<32x8xf32, #tpu.memory_space<vmem>>, vector<32x8xf32>
    %136 = vector.broadcast %134 : vector<1x8xf32> to vector<32x8xf32>
    %137 = arith.mulf %135, %136 : vector<32x8xf32>
    %cst_87 = arith.constant dense<0.000000e+00> : vector<32xf32>
    %138 = vector.multi_reduction <add>, %137, %cst_87 [1] : vector<32x8xf32> to vector<32xf32>
    %139 = vector.shape_cast %138 : vector<32xf32> to vector<32x1xf32>
    %c0_88 = arith.constant 0 : index
    %c0_89 = arith.constant 0 : index
    %140 = vector.load %arg10[%c0_88, %c0_89] : memref<32x1xf32, #tpu.memory_space<vmem>>, vector<32x1xf32>
    %141 = arith.addf %139, %140 : vector<32x1xf32>
    %cst_90 = arith.constant 0.166666672 : f32
    %142 = vector.broadcast %cst_90 : f32 to vector<32x1xf32>
    %143 = arith.mulf %141, %142 : vector<32x1xf32>
    %cst_91 = arith.constant 5.000000e-01 : f32
    %144 = vector.broadcast %cst_91 : f32 to vector<32x1xf32>
    %145 = arith.addf %143, %144 : vector<32x1xf32>
    %cst_92 = arith.constant 0.000000e+00 : f32
    %cst_93 = arith.constant 1.000000e+00 : f32
    %146 = vector.broadcast %cst_92 : f32 to vector<32x1xf32>
    %147 = arith.maximumf %146, %145 : vector<32x1xf32>
    %148 = vector.broadcast %cst_93 : f32 to vector<32x1xf32>
    %149 = arith.minimumf %148, %147 : vector<32x1xf32>
    %150 = vector.broadcast %149 : vector<32x1xf32> to vector<32x256xf32>
    %151 = arith.mulf %121, %150 : vector<32x256xf32>
    %c0_94 = arith.constant 0 : index
    %c0_95 = arith.constant 0 : index
    %152 = vector.load %arg11[%c0_94, %c0_95] : memref<16x32xf32, #tpu.memory_space<vmem>>, vector<16x32xf32>
    %cst_96 = arith.constant dense<0.000000e+00> : vector<16x256xf32>
    %153 = tpu.matmul %152, %151, %cst_96 {dimension_numbers = #tpu.dot_dimension_numbers<[1], [0], [0], [1], [0, 0, 1, 1], [], []>} : vector<16x32xf32>, vector<32x256xf32>, vector<16x256xf32> -> vector<16x256xf32>
    %c0_97 = arith.constant 0 : index
    %c0_98 = arith.constant 0 : index
    %154 = vector.load %arg12[%c0_97, %c0_98] : memref<16x1xf32, #tpu.memory_space<vmem>>, vector<16x1xf32>
    %155 = vector.broadcast %154 : vector<16x1xf32> to vector<16x256xf32>
    %156 = arith.addf %153, %155 : vector<16x256xf32>
    %157 = arith.addf %156, %1 : vector<16x256xf32>
    %c0_99 = arith.constant 0 : index
    %c0_100 = arith.constant 0 : index
    %c0_101 = arith.constant 0 : index
    %158 = vector.load %arg13[%c0_99, %c0_100, %c0_101] : memref<1x16x256xf32, #tpu.memory_space<vmem>>, vector<1x16x256xf32>
    %159 = vector.shape_cast %158 : vector<1x16x256xf32> to vector<16x256xf32>
    %160 = vector.shape_cast %157 : vector<16x256xf32> to vector<1x16x256xf32>
    tpu.vector_store %arg13[%c0_99, %c0_100, %c0_101], %160 {strides = array<i32>} : memref<1x16x256xf32, #tpu.memory_space<vmem>>, vector<1x16x256xf32>,
    return
  }
  func.func @transform_0(%arg0: i32) -> (i32, i32, i32) {
    %c0_i32 = arith.constant 0 : i32
    %c0_i32_0 = arith.constant 0 : i32
    %c0_i32_1 = arith.constant 0 : i32
    return %arg0, %c0_i32, %c0_i32_0 : i32, i32, i32
  }
  func.func @transform_1(%arg0: i32) -> (i32, i32, i32) {
    %c0_i32 = arith.constant 0 : i32
    %c0_i32_0 = arith.constant 0 : i32
    %c0_i32_1 = arith.constant 0 : i32
    %c0_i32_2 = arith.constant 0 : i32
    return %c0_i32, %c0_i32_0, %c0_i32_1 : i32, i32, i32
  }
  func.func @transform_2(%arg0: i32) -> (i32, i32) {
    %c0_i32 = arith.constant 0 : i32
    %c0_i32_0 = arith.constant 0 : i32
    %c0_i32_1 = arith.constant 0 : i32
    return %c0_i32, %c0_i32_0 : i32, i32
  }
  func.func @transform_3(%arg0: i32) -> (i32, i32) {
    %c0_i32 = arith.constant 0 : i32
    %c0_i32_0 = arith.constant 0 : i32
    %c0_i32_1 = arith.constant 0 : i32
    return %c0_i32, %c0_i32_0 : i32, i32
  }
  func.func @transform_4(%arg0: i32) -> (i32, i32, i32) {
    %c0_i32 = arith.constant 0 : i32
    %c0_i32_0 = arith.constant 0 : i32
    %c0_i32_1 = arith.constant 0 : i32
    %c0_i32_2 = arith.constant 0 : i32
    return %c0_i32, %c0_i32_0, %c0_i32_1 : i32, i32, i32
  }
  func.func @transform_5(%arg0: i32) -> (i32, i32) {
    %c0_i32 = arith.constant 0 : i32
    %c0_i32_0 = arith.constant 0 : i32
    %c0_i32_1 = arith.constant 0 : i32
    return %c0_i32, %c0_i32_0 : i32, i32
  }
  func.func @transform_6(%arg0: i32) -> (i32, i32) {
    %c0_i32 = arith.constant 0 : i32
    %c0_i32_0 = arith.constant 0 : i32
    %c0_i32_1 = arith.constant 0 : i32
    return %c0_i32, %c0_i32_0 : i32, i32
  }
  func.func @transform_7(%arg0: i32) -> (i32, i32) {
    %c0_i32 = arith.constant 0 : i32
    %c0_i32_0 = arith.constant 0 : i32
    %c0_i32_1 = arith.constant 0 : i32
    return %c0_i32, %c0_i32_0 : i32, i32
  }
  func.func @transform_8(%arg0: i32) -> (i32, i32) {
    %c0_i32 = arith.constant 0 : i32
    %c0_i32_0 = arith.constant 0 : i32
    %c0_i32_1 = arith.constant 0 : i32
    return %c0_i32, %c0_i32_0 : i32, i32
  }
  func.func @transform_9(%arg0: i32) -> (i32, i32) {
    %c0_i32 = arith.constant 0 : i32
    %c0_i32_0 = arith.constant 0 : i32
    %c0_i32_1 = arith.constant 0 : i32
    return %c0_i32, %c0_i32_0 : i32, i32
  }
  func.func @transform_10(%arg0: i32) -> (i32, i32) {
    %c0_i32 = arith.constant 0 : i32
    %c0_i32_0 = arith.constant 0 : i32
    %c0_i32_1 = arith.constant 0 : i32
    return %c0_i32, %c0_i32_0 : i32, i32
  }
  func.func @transform_11(%arg0: i32) -> (i32, i32) {
    %c0_i32 = arith.constant 0 : i32
    %c0_i32_0 = arith.constant 0 : i32
    %c0_i32_1 = arith.constant 0 : i32
    return %c0_i32, %c0_i32_0 : i32, i32
  }
  func.func @transform_12(%arg0: i32) -> (i32, i32, i32) {
    %c0_i32 = arith.constant 0 : i32
    %c0_i32_0 = arith.constant 0 : i32
    %c0_i32_1 = arith.constant 0 : i32
    return %arg0, %c0_i32, %c0_i32_0 : i32, i32, i32
  }
}

</mosaic_0001>

<llo_original>
// kernel: inverted_residual_forward.1
$region0: #{inverted_residual_forward.1}
  #allocation0 [shape = 'u32[]', space=smem, size = 0x4, offset = 0x4, fixed_abs, tag = 'smem constant byte address 0x4 - core index']
  #allocation1 [shape = 'u32[144,128]{1,0:T(1,128)}', space=vmem, size = 0x12000, scoped, tag = 'internal scratch']
  #allocation2 [shape = 'f32[32,512]{1,0:T(8,128)}', space=vmem, size = 0x10000, scoped, tag = 'scratch operand']
  %s0 = inlined_call_operand.vmem [shape: f32[2,16,256], index: 0, kind: input, shape index: {}]
  %s1 = inlined_call_operand.vmem [shape: f32[9,1,256], index: 1, kind: input, shape index: {}]
  %s2 = inlined_call_operand.vmem [shape: f32[32,16], index: 2, kind: input, shape index: {}]
  %s3 = inlined_call_operand.vmem [shape: f32[32,1], index: 3, kind: input, shape index: {}]
  %s4 = inlined_call_operand.vmem [shape: f32[9,32,1], index: 4, kind: input, shape index: {}]
  %s5 = inlined_call_operand.vmem [shape: f32[32,1], index: 5, kind: input, shape index: {}]
  %s6 = inlined_call_operand.vmem [shape: f32[32,8], index: 6, kind: input, shape index: {}]
  %s7 = inlined_call_operand.vmem [shape: f32[1,8], index: 7, kind: input, shape index: {}]
  %s8 = inlined_call_operand.vmem [shape: f32[32,8], index: 8, kind: input, shape index: {}]
  %s9 = inlined_call_operand.vmem [shape: f32[32,1], index: 9, kind: input, shape index: {}]
  %s10 = inlined_call_operand.vmem [shape: f32[16,32], index: 10, kind: input, shape index: {}]
  %s11 = inlined_call_operand.vmem [shape: f32[16,1], index: 11, kind: input, shape index: {}]
  %s12 = inlined_call_operand.vmem [shape: f32[2,16,256], index: 12, kind: output, shape index: {}]
  %s13 = sld [smem:[#allocation0]]
  $region81: #{inverted_residual_forward.1} parent=0
    _
  %s15 = ssub.s32 1, %s13
  %s16 = scalar_select 0, %s15, %s13
  loop: start=0, step=1, limit=4
  $region2: #{inverted_residual_forward.1} parent=0 // loop_pre_header
    _
  $region3: #{inverted_residual_forward.1} parent=0 // loop_header
    %s18 = sphi 0, %s22
    %p19 = scmp.ge.s32.totalorder %s18, 4
    %s28 = sphi 0, %s30
    %s31 = sphi 0, %s28
    %s32 = sphi 0, %s31
    %s48 = sphi 0, %s32
    %s52 = sphi 0, %s52
    %s54 = sphi 0, %s52
    %s55 = sphi 0, %s54
    %s69 = sphi 0, %s55
    %s73 = sphi 0, %s73
    %s75 = sphi 0, %s73
    %s76 = sphi 0, %s75
    %s90 = sphi 0, %s76
    %s94 = sphi 0, %s94
    %s96 = sphi 0, %s94
    %s97 = sphi 0, %s96
    %s111 = sphi 0, %s97
    %s115 = sphi 0, %s115
    %s117 = sphi 0, %s115
    %s118 = sphi 0, %s117
    %s132 = sphi 0, %s118
    %s136 = sphi 0, %s136
    %s138 = sphi 0, %s136
    %s139 = sphi 0, %s138
    %s153 = sphi 0, %s139
    %s157 = sphi 0, %s157
    %s159 = sphi 0, %s157
    %s160 = sphi 0, %s159
    %s174 = sphi 0, %s160
    %s178 = sphi 0, %s178
    %s180 = sphi 0, %s178
    %s181 = sphi 0, %s180
    %s195 = sphi 0, %s181
    %s199 = sphi 0, %s199
    %s201 = sphi 0, %s199
    %s202 = sphi 0, %s201
    %s216 = sphi 0, %s202
    %s220 = sphi 0, %s220
    %s222 = sphi 0, %s220
    %s223 = sphi 0, %s222
    %s237 = sphi 0, %s223
    %s241 = sphi 0, %s241
    %s243 = sphi 0, %s241
    %s244 = sphi 0, %s243
    %s258 = sphi 0, %s244
    %s262 = sphi 0, %s262
    %s264 = sphi 0, %s262
    %s265 = sphi 0, %s264
    %s279 = sphi 0, %s265
    %s285 = sphi 0, %s287
    %s288 = sphi 0, %s285
    %s289 = sphi 0, %s288
    %s305 = sphi 0, %s289
  $region4: #{inverted_residual_forward.1} parent=0 // loop_header_branch
    %21 = sbr.rel (%p19) target = $region8
  $region5: #{inverted_residual_forward.1} parent=0 // loop_body
    %s23 = ssub.s32 %s18, 1
    %s24 = ssub.s32 %s18, 2
    %s25 = sadd.s32 %s18, 1
    %s26 = ssub.s32 %s18, %s25
    %p27 = scmp.eq.s32.totalorder %s26, 0
    %s29 = sadd.s32 %s28, 1
    %s30 = scalar_select %p27, %s28, %s29
    %p33 = pneg %p27
    %p34 = scmp.eq.s32.totalorder %s18, 1
    %p35 = por %p33, %p34
    %p36 = scmp.ne.s32.totalorder %s28, %s31
    %p37 = scmp.eq.s32.totalorder %s18, 0
    %p38 = por %p36, %p37
    %p39 = scmp.ne.s32.totalorder %s28, %s31
    %p40 = scmp.eq.s32.totalorder %s23, 1
    %p41 = por %p39, %p40
    %p42 = scmp.ne.s32.totalorder %s31, %s32
    %p43 = scmp.eq.s32.totalorder %s23, 0
    %p44 = por %p42, %p43
    %p45 = scmp.ne.s32.totalorder %s31, %s32
    %p46 = scmp.eq.s32.totalorder %s24, 1
    %p47 = por %p45, %p46
    %p49 = scmp.ne.s32.totalorder %s32, %s48
    %p50 = scmp.eq.s32.totalorder %s24, 0
    %p51 = por %p49, %p50
    %s53 = sadd.s32 %s52, 1
    %p56 = scmp.eq.s32.totalorder %s18, 1
    %p57 = scmp.ne.s32.totalorder %s52, %s54
    %p58 = scmp.eq.s32.totalorder %s18, 0
    %p59 = por %p57, %p58
    %p60 = scmp.ne.s32.totalorder %s52, %s54
    %p61 = scmp.eq.s32.totalorder %s23, 1
    %p62 = por %p60, %p61
    %p63 = scmp.ne.s32.totalorder %s54, %s55
    %p64 = scmp.eq.s32.totalorder %s23, 0
    %p65 = por %p63, %p64
    %p66 = scmp.ne.s32.totalorder %s54, %s55
    %p67 = scmp.eq.s32.totalorder %s24, 1
    %p68 = por %p66, %p67
    %p70 = scmp.ne.s32.totalorder %s55, %s69
    %p71 = scmp.eq.s32.totalorder %s24, 0
    %p72 = por %p70, %p71
    %s74 = sadd.s32 %s73, 1
    %p77 = scmp.eq.s32.totalorder %s18, 1
    %p78 = scmp.ne.s32.totalorder %s73, %s75
    %p79 = scmp.eq.s32.totalorder %s18, 0
    %p80 = por %p78, %p79
    %p81 = scmp.ne.s32.totalorder %s73, %s75
    %p82 = scmp.eq.s32.totalorder %s23, 1
    %p83 = por %p81, %p82
    %p84 = scmp.ne.s32.totalorder %s75, %s76
    %p85 = scmp.eq.s32.totalorder %s23, 0
    %p86 = por %p84, %p85
    %p87 = scmp.ne.s32.totalorder %s75, %s76
    %p88 = scmp.eq.s32.totalorder %s24, 1
    %p89 = por %p87, %p88
    %p91 = scmp.ne.s32.totalorder %s76, %s90
    %p92 = scmp.eq.s32.totalorder %s24, 0
    %p93 = por %p91, %p92
    %s95 = sadd.s32 %s94, 1
    %p98 = scmp.eq.s32.totalorder %s18, 1
    %p99 = scmp.ne.s32.totalorder %s94, %s96
    %p100 = scmp.eq.s32.totalorder %s18, 0
    %p101 = por %p99, %p100
    %p102 = scmp.ne.s32.totalorder %s94, %s96
    %p103 = scmp.eq.s32.totalorder %s23, 1
    %p104 = por %p102, %p103
    %p105 = scmp.ne.s32.totalorder %s96, %s97
    %p106 = scmp.eq.s32.totalorder %s23, 0
    %p107 = por %p105, %p106
    %p108 = scmp.ne.s32.totalorder %s96, %s97
    %p109 = scmp.eq.s32.totalorder %s24, 1
    %p110 = por %p108, %p109
    %p112 = scmp.ne.s32.totalorder %s97, %s111
    %p113 = scmp.eq.s32.totalorder %s24, 0
    %p114 = por %p112, %p113
    %s116 = sadd.s32 %s115, 1
    %p119 = scmp.eq.s32.totalorder %s18, 1
    %p120 = scmp.ne.s32.totalorder %s115, %s117
    %p121 = scmp.eq.s32.totalorder %s18, 0
    %p122 = por %p120, %p121
    %p123 = scmp.ne.s32.totalorder %s115, %s117
    %p124 = scmp.eq.s32.totalorder %s23, 1
    %p125 = por %p123, %p124
    %p126 = scmp.ne.s32.totalorder %s117, %s118
    %p127 = scmp.eq.s32.totalorder %s23, 0
    %p128 = por %p126, %p127
    %p129 = scmp.ne.s32.totalorder %s117, %s118
    %p130 = scmp.eq.s32.totalorder %s24, 1
    %p131 = por %p129, %p130
    %p133 = scmp.ne.s32.totalorder %s118, %s132
    %p134 = scmp.eq.s32.totalorder %s24, 0
    %p135 = por %p133, %p134
    %s137 = sadd.s32 %s136, 1
    %p140 = scmp.eq.s32.totalorder %s18, 1
    %p141 = scmp.ne.s32.totalorder %s136, %s138
    %p142 = scmp.eq.s32.totalorder %s18, 0
    %p143 = por %p141, %p142
    %p144 = scmp.ne.s32.totalorder %s136, %s138
    %p145 = scmp.eq.s32.totalorder %s23, 1
    %p146 = por %p144, %p145
    %p147 = scmp.ne.s32.totalorder %s138, %s139
    %p148 = scmp.eq.s32.totalorder %s23, 0
    %p149 = por %p147, %p148
    %p150 = scmp.ne.s32.totalorder %s138, %s139
    %p151 = scmp.eq.s32.totalorder %s24, 1
    %p152 = por %p150, %p151
    %p154 = scmp.ne.s32.totalorder %s139, %s153
    %p155 = scmp.eq.s32.totalorder %s24, 0
    %p156 = por %p154, %p155
    %s158 = sadd.s32 %s157, 1
    %p161 = scmp.eq.s32.totalorder %s18, 1
    %p162 = scmp.ne.s32.totalorder %s157, %s159
    %p163 = scmp.eq.s32.totalorder %s18, 0
    %p164 = por %p162, %p163
    %p165 = scmp.ne.s32.totalorder %s157, %s159
    %p166 = scmp.eq.s32.totalorder %s23, 1
    %p167 = por %p165, %p166
    %p168 = scmp.ne.s32.totalorder %s159, %s160
    %p169 = scmp.eq.s32.totalorder %s23, 0
    %p170 = por %p168, %p169
    %p171 = scmp.ne.s32.totalorder %s159, %s160
    %p172 = scmp.eq.s32.totalorder %s24, 1
    %p173 = por %p171, %p172
    %p175 = scmp.ne.s32.totalorder %s160, %s174
    %p176 = scmp.eq.s32.totalorder %s24, 0
    %p177 = por %p175, %p176
    %s179 = sadd.s32 %s178, 1
    %p182 = scmp.eq.s32.totalorder %s18, 1
    %p183 = scmp.ne.s32.totalorder %s178, %s180
    %p184 = scmp.eq.s32.totalorder %s18, 0
    %p185 = por %p183, %p184
    %p186 = scmp.ne.s32.totalorder %s178, %s180
    %p187 = scmp.eq.s32.totalorder %s23, 1
    %p188 = por %p186, %p187
    %p189 = scmp.ne.s32.totalorder %s180, %s181
    %p190 = scmp.eq.s32.totalorder %s23, 0
    %p191 = por %p189, %p190
    %p192 = scmp.ne.s32.totalorder %s180, %s181
    %p193 = scmp.eq.s32.totalorder %s24, 1
    %p194 = por %p192, %p193
    %p196 = scmp.ne.s32.totalorder %s181, %s195
    %p197 = scmp.eq.s32.totalorder %s24, 0
    %p198 = por %p196, %p197
    %s200 = sadd.s32 %s199, 1
    %p203 = scmp.eq.s32.totalorder %s18, 1
    %p204 = scmp.ne.s32.totalorder %s199, %s201
    %p205 = scmp.eq.s32.totalorder %s18, 0
    %p206 = por %p204, %p205
    %p207 = scmp.ne.s32.totalorder %s199, %s201
    %p208 = scmp.eq.s32.totalorder %s23, 1
    %p209 = por %p207, %p208
    %p210 = scmp.ne.s32.totalorder %s201, %s202
    %p211 = scmp.eq.s32.totalorder %s23, 0
    %p212 = por %p210, %p211
    %p213 = scmp.ne.s32.totalorder %s201, %s202
    %p214 = scmp.eq.s32.totalorder %s24, 1
    %p215 = por %p213, %p214
    %p217 = scmp.ne.s32.totalorder %s202, %s216
    %p218 = scmp.eq.s32.totalorder %s24, 0
    %p219 = por %p217, %p218
    %s221 = sadd.s32 %s220, 1
    %p224 = scmp.eq.s32.totalorder %s18, 1
    %p225 = scmp.ne.s32.totalorder %s220, %s222
    %p226 = scmp.eq.s32.totalorder %s18, 0
    %p227 = por %p225, %p226
    %p228 = scmp.ne.s32.totalorder %s220, %s222
    %p229 = scmp.eq.s32.totalorder %s23, 1
    %p230 = por %p228, %p229
    %p231 = scmp.ne.s32.totalorder %s222, %s223
    %p232 = scmp.eq.s32.totalorder %s23, 0
    %p233 = por %p231, %p232
    %p234 = scmp.ne.s32.totalorder %s222, %s223
    %p235 = scmp.eq.s32.totalorder %s24, 1
    %p236 = por %p234, %p235
    %p238 = scmp.ne.s32.totalorder %s223, %s237
    %p239 = scmp.eq.s32.totalorder %s24, 0
    %p240 = por %p238, %p239
    %s242 = sadd.s32 %s241, 1
    %p245 = scmp.eq.s32.totalorder %s18, 1
    %p246 = scmp.ne.s32.totalorder %s241, %s243
    %p247 = scmp.eq.s32.totalorder %s18, 0
    %p248 = por %p246, %p247
    %p249 = scmp.ne.s32.totalorder %s241, %s243
    %p250 = scmp.eq.s32.totalorder %s23, 1
    %p251 = por %p249, %p250
    %p252 = scmp.ne.s32.totalorder %s243, %s244
    %p253 = scmp.eq.s32.totalorder %s23, 0
    %p254 = por %p252, %p253
    %p255 = scmp.ne.s32.totalorder %s243, %s244
    %p256 = scmp.eq.s32.totalorder %s24, 1
    %p257 = por %p255, %p256
    %p259 = scmp.ne.s32.totalorder %s244, %s258
    %p260 = scmp.eq.s32.totalorder %s24, 0
    %p261 = por %p259, %p260
    %s263 = sadd.s32 %s262, 1
    %p266 = scmp.eq.s32.totalorder %s18, 1
    %p267 = scmp.ne.s32.totalorder %s262, %s264
    %p268 = scmp.eq.s32.totalorder %s18, 0
    %p269 = por %p267, %p268
    %p270 = scmp.ne.s32.totalorder %s262, %s264
    %p271 = scmp.eq.s32.totalorder %s23, 1
    %p272 = por %p270, %p271
    %p273 = scmp.ne.s32.totalorder %s264, %s265
    %p274 = scmp.eq.s32.totalorder %s23, 0
    %p275 = por %p273, %p274
    %p276 = scmp.ne.s32.totalorder %s264, %s265
    %p277 = scmp.eq.s32.totalorder %s24, 1
    %p278 = por %p276, %p277
    %p280 = scmp.ne.s32.totalorder %s265, %s279
    %p281 = scmp.eq.s32.totalorder %s24, 0
    %p282 = por %p280, %p281
    %s283 = ssub.s32 %s18, %s25
    %p284 = scmp.eq.s32.totalorder %s283, 0
    %s286 = sadd.s32 %s285, 1
    %s287 = scalar_select %p284, %s285, %s286
    %p290 = pneg %p284
    %p291 = scmp.eq.s32.totalorder %s18, 1
    %p292 = por %p290, %p291
    %p293 = scmp.ne.s32.totalorder %s285, %s288
    %p294 = scmp.eq.s32.totalorder %s18, 0
    %p295 = por %p293, %p294
    %p296 = scmp.ne.s32.totalorder %s285, %s288
    %p297 = scmp.eq.s32.totalorder %s23, 1
    %p298 = por %p296, %p297
    %p299 = scmp.ne.s32.totalorder %s288, %s289
    %p300 = scmp.eq.s32.totalorder %s23, 0
    %p301 = por %p299, %p300
    %p302 = scmp.ne.s32.totalorder %s288, %s289
    %p303 = scmp.eq.s32.totalorder %s24, 1
    %p304 = por %p302, %p303
    %p306 = scmp.ne.s32.totalorder %s289, %s305
    %p307 = scmp.eq.s32.totalorder %s24, 0
    %p308 = por %p306, %p307
    %p309 = scmp.le.s32.totalorder 1, %s18
    %p310 = scmp.lt.s32.totalorder %s18, 3
    %p311 = pnand %p309, %p310
    %p312 = pneg %p311
    // Predicated region
    $region9: #{inverted_residual_forward.1} parent=5 // pred_check
      _
    $region10: #{inverted_residual_forward.1} parent=5 // pred_check_branch
      %314 = sbr.rel (%p311) target = $region12
    $region11: #{inverted_residual_forward.1} parent=5 // pred_region
      %s315 = ssub.s32 %s18, 1
      // Predicated region
      $region13: #{inverted_residual_forward.1} parent=11 // pred_check
        %p316 = pneg %p65
      $region14: #{inverted_residual_forward.1} parent=11 // pred_check_branch
        %318 = sbr.rel (%p316) target = $region16
      $region15: #{inverted_residual_forward.1} parent=11 // pred_region
        _
      $region16: #{inverted_residual_forward.1} parent=11 // pred_fallthru
        _
      // Predicated region
      $region17: #{inverted_residual_forward.1} parent=11 // pred_check
        %p319 = pneg %p86
      $region18: #{inverted_residual_forward.1} parent=11 // pred_check_branch
        %321 = sbr.rel (%p319) target = $region20
      $region19: #{inverted_residual_forward.1} parent=11 // pred_region
        _
      $region20: #{inverted_residual_forward.1} parent=11 // pred_fallthru
        _
      // Predicated region
      $region21: #{inverted_residual_forward.1} parent=11 // pred_check
        %p322 = pneg %p107
      $region22: #{inverted_residual_forward.1} parent=11 // pred_check_branch
        %324 = sbr.rel (%p322) target = $region24
      $region23: #{inverted_residual_forward.1} parent=11 // pred_region
        _
      $region24: #{inverted_residual_forward.1} parent=11 // pred_fallthru
        _
      // Predicated region
      $region25: #{inverted_residual_forward.1} parent=11 // pred_check
        %p325 = pneg %p128
      $region26: #{inverted_residual_forward.1} parent=11 // pred_check_branch
        %327 = sbr.rel (%p325) target = $region28
      $region27: #{inverted_residual_forward.1} parent=11 // pred_region
        _
      $region28: #{inverted_residual_forward.1} parent=11 // pred_fallthru
        _
      // Predicated region
      $region29: #{inverted_residual_forward.1} parent=11 // pred_check
        %p328 = pneg %p149
      $region30: #{inverted_residual_forward.1} parent=11 // pred_check_branch
        %330 = sbr.rel (%p328) target = $region32
      $region31: #{inverted_residual_forward.1} parent=11 // pred_region
        _
      $region32: #{inverted_residual_forward.1} parent=11 // pred_fallthru
        _
      // Predicated region
      $region33: #{inverted_residual_forward.1} parent=11 // pred_check
        %p331 = pneg %p170
      $region34: #{inverted_residual_forward.1} parent=11 // pred_check_branch
        %333 = sbr.rel (%p331) target = $region36
      $region35: #{inverted_residual_forward.1} parent=11 // pred_region
        _
      $region36: #{inverted_residual_forward.1} parent=11 // pred_fallthru
        _
      // Predicated region
      $region37: #{inverted_residual_forward.1} parent=11 // pred_check
        %p334 = pneg %p191
      $region38: #{inverted_residual_forward.1} parent=11 // pred_check_branch
        %336 = sbr.rel (%p334) target = $region40
      $region39: #{inverted_residual_forward.1} parent=11 // pred_region
        _
      $region40: #{inverted_residual_forward.1} parent=11 // pred_fallthru
        _
      // Predicated region
      $region41: #{inverted_residual_forward.1} parent=11 // pred_check
        %p337 = pneg %p212
      $region42: #{inverted_residual_forward.1} parent=11 // pred_check_branch
        %339 = sbr.rel (%p337) target = $region44
      $region43: #{inverted_residual_forward.1} parent=11 // pred_region
        _
      $region44: #{inverted_residual_forward.1} parent=11 // pred_fallthru
        _
      // Predicated region
      $region45: #{inverted_residual_forward.1} parent=11 // pred_check
        %p340 = pneg %p233
      $region46: #{inverted_residual_forward.1} parent=11 // pred_check_branch
        %342 = sbr.rel (%p340) target = $region48
      $region47: #{inverted_residual_forward.1} parent=11 // pred_region
        _
      $region48: #{inverted_residual_forward.1} parent=11 // pred_fallthru
        _
      // Predicated region
      $region49: #{inverted_residual_forward.1} parent=11 // pred_check
        %p343 = pneg %p254
      $region50: #{inverted_residual_forward.1} parent=11 // pred_check_branch
        %345 = sbr.rel (%p343) target = $region52
      $region51: #{inverted_residual_forward.1} parent=11 // pred_region
        _
      $region52: #{inverted_residual_forward.1} parent=11 // pred_fallthru
        _
      // Predicated region
      $region53: #{inverted_residual_forward.1} parent=11 // pred_check
        %p346 = pneg %p275
      $region54: #{inverted_residual_forward.1} parent=11 // pred_check_branch
        %348 = sbr.rel (%p346) target = $region56
      $region55: #{inverted_residual_forward.1} parent=11 // pred_region
        _
      $region56: #{inverted_residual_forward.1} parent=11 // pred_fallthru
        _
    $region12: #{inverted_residual_forward.1} parent=5 // pred_fallthru
      _
    %p349 = scmp.lt.s32.totalorder %s18, 2
    // Predicated region
    $region57: #{inverted_residual_forward.1} parent=5 // pred_check
      %p350 = pneg %p349
    $region58: #{inverted_residual_forward.1} parent=5 // pred_check_branch
      %352 = sbr.rel (%p350) target = $region60
    $region59: #{inverted_residual_forward.1} parent=5 // pred_region
      // Predicated region
      $region61: #{inverted_residual_forward.1} parent=59 // pred_check
        %p353 = pneg %p38
      $region62: #{inverted_residual_forward.1} parent=59 // pred_check_branch
        %355 = sbr.rel (%p353) target = $region64
      $region63: #{inverted_residual_forward.1} parent=59 // pred_region
        %p356 = scmp.lt.s32.totalorder %s18, 1
        %s357 = scalar_select %p356, %s18, 1
        %s358 = smul.addr %s357, 4
        %s359 = smul.addr %s358, 8
        %s360 = scalar_lea.vmem %s0, %s359
      $region64: #{inverted_residual_forward.1} parent=59 // pred_fallthru
        _
    $region60: #{inverted_residual_forward.1} parent=5 // pred_fallthru
      _
    %p361 = scmp.le.s32.totalorder 1, %s18
    %p362 = scmp.lt.s32.totalorder %s18, 3
    %p363 = pnand %p361, %p362
    %p364 = pneg %p363
    // Predicated region
    $region65: #{inverted_residual_forward.1} parent=5 // pred_check
      _
    $region66: #{inverted_residual_forward.1} parent=5 // pred_check_branch
      %366 = sbr.rel (%p363) target = $region68
    $region67: #{inverted_residual_forward.1} parent=5 // pred_region
      %s367 = ssub.s32 %s18, 1
      %p368 = scmp.lt.s32.totalorder %s23, 1
      %s369 = scalar_select %p368, %s23, 1
      %s370 = smul.addr %s369, 4
      %s371 = smul.addr %s370, 8
      %s372 = scalar_lea.vmem %s0, %s371
      %p373 = pneg %p44
      %p374 = pneg %p41
      %p375 = pneg %p65
      %p376 = pneg %p62
      %p377 = pneg %p86
      %p378 = pneg %p83
      %p379 = pneg %p107
      %p380 = pneg %p104
      %p381 = pneg %p128
      %p382 = pneg %p125
      %p383 = pneg %p149
      %p384 = pneg %p146
      %p385 = pneg %p170
      %p386 = pneg %p167
      %p387 = pneg %p191
      %p388 = pneg %p188
      %p389 = pneg %p212
      %p390 = pneg %p209
      %p391 = pneg %p233
      %p392 = pneg %p230
      %p393 = pneg %p254
      %p394 = pneg %p251
      %p395 = pneg %p275
      %p396 = pneg %p272
      %p397 = pneg %p301
      %p398 = pneg %p298
      %p399 = scmp.lt.s32.totalorder %s23, 1
      %s400 = scalar_select %p399, %s23, 1
      %s401 = smul.addr %s400, 4
      %s402 = smul.addr %s401, 8
      %s403 = scalar_lea.vmem %s12, %s402
      %p404 = scmp.lt.s32.totalorder %s23, 1
      %s405 = scalar_select %p404, %s23, 1
      %s406 = smul.addr %s405, 4
      %s407 = smul.addr %s406, 8
      %s408 = scalar_lea.vmem %s0, %s407
      %p409 = scmp.lt.s32.totalorder %s23, 1
      %s410 = scalar_select %p409, %s23, 1
      %s411 = smul.addr %s410, 4
      %s412 = smul.addr %s411, 8
      %s413 = scalar_lea.vmem %s12, %s412
      %v414 = vld [vmem:[%s408] sm:$0xff]
      %v415 = vld [vmem:[%s408 + $0x8] sm:$0xff]
      %v416 = vld [vmem:[%s408 + $0x10] sm:$0xff]
      %v417 = vld [vmem:[%s408 + $0x18] sm:$0xff]
      %v418 = vld [vmem:[%s2] sm:$0xff]
      %v419 = vld [vmem:[%s2 + $0x8] sm:$0xff]
      %v420 = vld [vmem:[%s2 + $0x10] sm:$0xff]
      %v421 = vld [vmem:[%s2 + $0x18] sm:$0xff]
      %v422 = vld [vmem:[%s3] sm:$0xff]
      %v423 = vld [vmem:[%s3 + $0x8] sm:$0xff]
      %v424 = vld [vmem:[%s3 + $0x10] sm:$0xff]
      %v425 = vld [vmem:[%s3 + $0x18] sm:$0xff]
      %427 = vset.pattern.permute.xlu0 0
      %428 = vperm.xlu0 %427, %v422
      %v429 = vpop.permute.xlu0 %428
      %432 = vset.pattern.permute.xlu0 0
      %433 = vperm.xlu0 %432, %v423
      %v434 = vpop.permute.xlu0 %433
      %437 = vset.pattern.permute.xlu0 0
      %438 = vperm.xlu0 %437, %v424
      %v439 = vpop.permute.xlu0 %438
      %442 = vset.pattern.permute.xlu0 0
      %443 = vperm.xlu0 %442, %v425
      %v444 = vpop.permute.xlu0 %443
      %vm446 = vcmask 130048
      %v448 = vsel %vm446, %v418, 0
      %v451 = vsel %vm446, %v419, 0
      %v454 = vsel %vm446, %v420, 0
      %v457 = vsel %vm446, %v421, 0
      %459 = vmatprep.subr.mxu0 %v415
      %460 = vmatpush1.msra.mxu0 %v414
      %461 = vmatprep.subr.mxu0 %v417
      %462 = vmatpush1.msra.mxu0 %v416
      %463 = vmatprep.subr.mxu0 0.0
      %464 = vmatpush1.msra.mxu0 0.0
      %465 = vmatprep.subr.mxu0 0.0
      %466 = vmatpush1.msra.mxu0 0.0
      %467 = vmatprep.subr.mxu0 0.0
      %468 = vmatpush1.msra.mxu0 0.0
      %469 = vmatprep.subr.mxu0 0.0
      %470 = vmatpush1.msra.mxu0 0.0
      %471 = vmatprep.subr.mxu0 0.0
      %472 = vmatpush1.msra.mxu0 0.0
      %473 = vmatprep.subr.mxu0 0.0
      %474 = vmatpush1.msra.mxu0 0.0
      %475 = vmatprep.subr.mxu0 0.0
      %476 = vmatpush1.msra.mxu0 0.0
      %477 = vmatprep.subr.mxu0 0.0
      %478 = vmatpush1.msra.mxu0 0.0
      %479 = vmatprep.subr.mxu0 0.0
      %480 = vmatpush1.msra.mxu0 0.0
      %481 = vmatprep.subr.mxu0 0.0
      %482 = vmatpush1.msra.mxu0 0.0
      %483 = vmatprep.subr.mxu0 0.0
      %484 = vmatpush1.msra.mxu0 0.0
      %485 = vmatprep.subr.mxu0 0.0
      %486 = vmatpush1.msra.mxu0 0.0
      %487 = vmatprep.subr.mxu0 0.0
      %488 = vmatpush1.msra.mxu0 0.0
      %489 = vmatprep.subr.mxu0 0.0
      %490 = vmatpush1.msra.mxu0 0.0
      %491 = vmatprep.subr.mxu0 0.0
      %492 = vmatpush1.msra.mxu0 0.0
      %493 = vmatprep.subr.mxu0 0.0
      %494 = vmatpush1.msra.mxu0 0.0
      %495 = vmatprep.subr.mxu0 0.0
      %496 = vmatpush1.msra.mxu0 0.0
      %497 = vmatprep.subr.mxu0 0.0
      %498 = vmatpush1.msra.mxu0 0.0
      %499 = vmatprep.subr.mxu0 0.0
      %500 = vmatpush1.msra.mxu0 0.0
      %501 = vmatprep.subr.mxu0 0.0
      %502 = vmatpush1.msra.mxu0 0.0
      %503 = vmatprep.subr.mxu0 0.0
      %504 = vmatpush1.msra.mxu0 0.0
      %505 = vmatprep.subr.mxu0 0.0
      %506 = vmatpush1.msra.mxu0 0.0
      %507 = vmatprep.subr.mxu0 0.0
      %508 = vmatpush1.msra.mxu0 0.0
      %509 = vmatprep.subr.mxu0 0.0
      %510 = vmatpush1.msra.mxu0 0.0
      %511 = vmatprep.subr.mxu0 0.0
      %512 = vmatpush1.msra.mxu0 0.0
      %513 = vmatprep.subr.mxu0 0.0
      %514 = vmatpush1.msra.mxu0 0.0
      %515 = vmatprep.subr.mxu0 0.0
      %516 = vmatpush1.msra.mxu0 0.0
      %517 = vmatprep.subr.mxu0 0.0
      %518 = vmatpush1.msra.mxu0 0.0
      %519 = vmatprep.subr.mxu0 0.0
      %520 = vmatpush1.msra.mxu0 0.0
      %521 = vmatprep.subr.mxu0 0.0
      %522 = vmatpush1.msra.mxu0 0.0
      %523 = vmatprep.mubr.f32.mxu0 0.0
      %524 = vmatmul.mubr.f32.gmra.mrb[0].mxu0 %v448
      %v525 = vpop.f32.mrb[0].mxu0
      %v526 = vadd.f32 %v429, %v525
      %v527 = vpop.f32.mrb[0].mxu0
      %v528 = vadd.f32 %v429, %v527
      %529 = vmatprep.mubr.f32.mxu0 0.0
      %530 = vmatmul.mubr.f32.gmra.mrb[0].mxu0 %v451
      %v531 = vpop.f32.mrb[0].mxu0
      %v532 = vadd.f32 %v434, %v531
      %v533 = vpop.f32.mrb[0].mxu0
      %v534 = vadd.f32 %v434, %v533
      %535 = vmatprep.mubr.f32.mxu0 0.0
      %536 = vmatmul.mubr.f32.gmra.mrb[0].mxu0 %v454
      %v537 = vpop.f32.mrb[0].mxu0
      %v538 = vadd.f32 %v439, %v537
      %v539 = vpop.f32.mrb[0].mxu0
      %v540 = vadd.f32 %v439, %v539
      %541 = vmatprep.mubr.f32.mxu0 0.0
      %542 = vmatmul.mubr.f32.gmra.mrb[0].mxu0 %v457
      %v543 = vpop.f32.mrb[0].mxu0
      %v544 = vadd.f32 %v444, %v543
      %v545 = vpop.f32.mrb[0].mxu0
      %v546 = vadd.f32 %v444, %v545
      %547 = vdwg.mxu0
      %v548 = vadd.f32 %v526, 3.0
      %v549 = vadd.f32 %v528, 3.0
      %v550 = vadd.f32 %v532, 3.0
      %v551 = vadd.f32 %v534, 3.0
      %v552 = vadd.f32 %v538, 3.0
      %v553 = vadd.f32 %v540, 3.0
      %v554 = vadd.f32 %v544, 3.0
      %v555 = vadd.f32 %v546, 3.0
      %v556 = vmax.f32 %v548, 0.0
      %v557 = vmax.f32 %v549, 0.0
      %v558 = vmax.f32 %v550, 0.0
      %v559 = vmax.f32 %v551, 0.0
      %v560 = vmax.f32 %v552, 0.0
      %v561 = vmax.f32 %v553, 0.0
      %v562 = vmax.f32 %v554, 0.0
      %v563 = vmax.f32 %v555, 0.0
      %v564 = vmin.f32 %v556, 6.0
      %v565 = vmin.f32 %v557, 6.0
      %v566 = vmin.f32 %v558, 6.0
      %v567 = vmin.f32 %v559, 6.0
      %v568 = vmin.f32 %v560, 6.0
      %v569 = vmin.f32 %v561, 6.0
      %v570 = vmin.f32 %v562, 6.0
      %v571 = vmin.f32 %v563, 6.0
      %v572 = vmul.f32 %v526, %v564
      %v573 = vmul.f32 %v528, %v565
      %v574 = vmul.f32 %v532, %v566
      %v575 = vmul.f32 %v534, %v567
      %v576 = vmul.f32 %v538, %v568
      %v577 = vmul.f32 %v540, %v569
      %v578 = vmul.f32 %v544, %v570
      %v579 = vmul.f32 %v546, %v571
      %v580 = vmul.f32 %v572, 0.16666667
      %v581 = vmul.f32 %v573, 0.16666667
      %v582 = vmul.f32 %v574, 0.16666667
      %v583 = vmul.f32 %v575, 0.16666667
      %v584 = vmul.f32 %v576, 0.16666667
      %v585 = vmul.f32 %v577, 0.16666667
      %v586 = vmul.f32 %v578, 0.16666667
      %v587 = vmul.f32 %v579, 0.16666667
      %588 = vst [vmem:[#allocation2] sm:$0xff] 0.0
      %589 = vst [vmem:[#allocation2 + $0x8] sm:$0xff] 0.0
      %590 = vst [vmem:[#allocation2 + $0x10] sm:$0xff] 0.0
      %591 = vst [vmem:[#allocation2 + $0x18] sm:$0xff] 0.0
      %592 = vst [vmem:[#allocation2 + $0x20] sm:$0xff] 0.0
      %593 = vst [vmem:[#allocation2 + $0x28] sm:$0xff] 0.0
      %594 = vst [vmem:[#allocation2 + $0x30] sm:$0xff] 0.0
      %595 = vst [vmem:[#allocation2 + $0x38] sm:$0xff] 0.0
      %596 = vst [vmem:[#allocation2 + $0x40] sm:$0xff] 0.0
      %597 = vst [vmem:[#allocation2 + $0x48] sm:$0xff] 0.0
      %598 = vst [vmem:[#allocation2 + $0x50] sm:$0xff] 0.0
      %599 = vst [vmem:[#allocation2 + $0x58] sm:$0xff] 0.0
      %600 = vst [vmem:[#allocation2 + $0x60] sm:$0xff] 0.0
      %601 = vst [vmem:[#allocation2 + $0x68] sm:$0xff] 0.0
      %602 = vst [vmem:[#allocation2 + $0x70] sm:$0xff] 0.0
      %603 = vst [vmem:[#allocation2 + $0x78] sm:$0xff] 0.0
      %604 = vst [vmem:[#allocation2 + $0x8] sm:$0xff] %v580
      %605 = vst [vmem:[#allocation2 + $0x10] sm:$0xff] %v581
      %606 = vst [vmem:[#allocation2 + $0x28] sm:$0xff] %v582
      %607 = vst [vmem:[#allocation2 + $0x30] sm:$0xff] %v583
      %608 = vst [vmem:[#allocation2 + $0x48] sm:$0xff] %v584
      %609 = vst [vmem:[#allocation2 + $0x50] sm:$0xff] %v585
      %610 = vst [vmem:[#allocation2 + $0x68] sm:$0xff] %v586
      %611 = vst [vmem:[#allocation2 + $0x70] sm:$0xff] %v587
      %v612 = vld [vmem:[#allocation2] sm:$0xff]
      %v613 = vld [vmem:[#allocation2 + $0x8] sm:$0xff]
      %v614 = vld [vmem:[#allocation2 + $0x10] sm:$0xff]
      %v615 = vld [vmem:[#allocation2 + $0x20] sm:$0xff]
      %v616 = vld [vmem:[#allocation2 + $0x28] sm:$0xff]
      %v617 = vld [vmem:[#allocation2 + $0x30] sm:$0xff]
      %v618 = vld [vmem:[#allocation2 + $0x40] sm:$0xff]
      %v619 = vld [vmem:[#allocation2 + $0x48] sm:$0xff]
      %v620 = vld [vmem:[#allocation2 + $0x50] sm:$0xff]
      %v621 = vld [vmem:[#allocation2 + $0x60] sm:$0xff]
      %v622 = vld [vmem:[#allocation2 + $0x68] sm:$0xff]
      %v623 = vld [vmem:[#allocation2 + $0x70] sm:$0xff]
      %v624 = vld [vmem:[%s1] sm:$0x3]
      %v626 = vlaneseq
      %v627 = vshrl.u32 %v626, 7
      %v628 = vsub.s32 0, %v627
      %v629 = vrot.slane %v624, %v628
      %v630 = vlaneseq
      %v631 = vshrl.u32 %v630, 7
      %v632 = vsub.s32 1, %v631
      %v633 = vrot.slane %v624, %v632
      %634 = vrot.lane.b32.xlu0 %v629, 111
      %v635 = vpop.permute.xlu0 %634
      %636 = vrot.lane.b32.xlu0 %v633, 111
      %v637 = vpop.permute.xlu0 %636
      %vm638 = vcmask 908288
      %v639 = vsel %vm638, %v635, %v637
      %v643 = vmul.f32 %v612, %v635
      %v644 = vmul.f32 %v613, %v639
      %v645 = vmul.f32 %v614, %v637
      %v646 = vmul.f32 %v615, %v635
      %v647 = vmul.f32 %v616, %v639
      %v648 = vmul.f32 %v617, %v637
      %v649 = vmul.f32 %v618, %v635
      %v650 = vmul.f32 %v619, %v639
      %v651 = vmul.f32 %v620, %v637
      %v652 = vmul.f32 %v621, %v635
      %v653 = vmul.f32 %v622, %v639
      %v654 = vmul.f32 %v623, %v637
      %v655 = vld [vmem:[%s4] sm:$0xff]
      %v656 = vld [vmem:[%s4 + $0x8] sm:$0xff]
      %v657 = vld [vmem:[%s4 + $0x10] sm:$0xff]
      %v658 = vld [vmem:[%s4 + $0x18] sm:$0xff]
      %660 = vset.pattern.permute.xlu0 0
      %661 = vperm.xlu0 %660, %v655
      %v662 = vpop.permute.xlu0 %661
      %665 = vset.pattern.permute.xlu0 0
      %666 = vperm.xlu0 %665, %v656
      %v667 = vpop.permute.xlu0 %666
      %670 = vset.pattern.permute.xlu0 0
      %671 = vperm.xlu0 %670, %v657
      %v672 = vpop.permute.xlu0 %671
      %675 = vset.pattern.permute.xlu0 0
      %676 = vperm.xlu0 %675, %v658
      %v677 = vpop.permute.xlu0 %676
      %v679 = vmul.f32 %v643, %v662
      %v680 = vmul.f32 %v644, %v662
      %v681 = vmul.f32 %v645, %v662
      %v682 = vmul.f32 %v646, %v667
      %v683 = vmul.f32 %v647, %v667
      %v684 = vmul.f32 %v648, %v667
      %v685 = vmul.f32 %v649, %v672
      %v686 = vmul.f32 %v650, %v672
      %v687 = vmul.f32 %v651, %v672
      %v688 = vmul.f32 %v652, %v677
      %v689 = vmul.f32 %v653, %v677
      %v690 = vmul.f32 %v654, %v677
      %v691 = vadd.f32 %v679, 0.0
      %v692 = vadd.f32 %v680, 0.0
      %v693 = vadd.f32 %v681, 0.0
      %v694 = vadd.f32 %v682, 0.0
      %v695 = vadd.f32 %v683, 0.0
      %v696 = vadd.f32 %v684, 0.0
      %v697 = vadd.f32 %v685, 0.0
      %v698 = vadd.f32 %v686, 0.0
      %v699 = vadd.f32 %v687, 0.0
      %v700 = vadd.f32 %v688, 0.0
      %v701 = vadd.f32 %v689, 0.0
      %v702 = vadd.f32 %v690, 0.0
      %s703 = scalar_lea.vmem %s1, 2
      %v704 = vld [vmem:[%s703] sm:$0x3]
      %v706 = vlaneseq
      %v707 = vshrl.u32 %v706, 7
      %v708 = vsub.s32 0, %v707
      %v709 = vrot.slane %v704, %v708
      %v710 = vlaneseq
      %v711 = vshrl.u32 %v710, 7
      %v712 = vsub.s32 1, %v711
      %v713 = vrot.slane %v704, %v712
      %714 = vrot.lane.b32.xlu0 %v709, 112
      %v715 = vpop.permute.xlu0 %714
      %716 = vrot.lane.b32.xlu0 %v713, 112
      %v717 = vpop.permute.xlu0 %716
      %vm718 = vcmask 916480
      %v719 = vsel %vm718, %v715, %v717
      %v723 = vmul.f32 %v612, %v715
      %v724 = vmul.f32 %v613, %v719
      %v725 = vmul.f32 %v614, %v717
      %v726 = vmul.f32 %v615, %v715
      %v727 = vmul.f32 %v616, %v719
      %v728 = vmul.f32 %v617, %v717
      %v729 = vmul.f32 %v618, %v715
      %v730 = vmul.f32 %v619, %v719
      %v731 = vmul.f32 %v620, %v717
      %v732 = vmul.f32 %v621, %v715
      %v733 = vmul.f32 %v622, %v719
      %v734 = vmul.f32 %v623, %v717
      %s735 = scalar_lea.vmem %s4, 32
      %v736 = vld [vmem:[%s735] sm:$0xff]
      %v737 = vld [vmem:[%s735 + $0x8] sm:$0xff]
      %v738 = vld [vmem:[%s735 + $0x10] sm:$0xff]
      %v739 = vld [vmem:[%s735 + $0x18] sm:$0xff]
      %741 = vset.pattern.permute.xlu0 0
      %742 = vperm.xlu0 %741, %v736
      %v743 = vpop.permute.xlu0 %742
      %746 = vset.pattern.permute.xlu0 0
      %747 = vperm.xlu0 %746, %v737
      %v748 = vpop.permute.xlu0 %747
      %751 = vset.pattern.permute.xlu0 0
      %752 = vperm.xlu0 %751, %v738
      %v753 = vpop.permute.xlu0 %752
      %756 = vset.pattern.permute.xlu0 0
      %757 = vperm.xlu0 %756, %v739
      %v758 = vpop.permute.xlu0 %757
      %v760 = vmul.f32 %v723, %v743
      %v761 = vmul.f32 %v724, %v743
      %v762 = vmul.f32 %v725, %v743
      %v763 = vmul.f32 %v726, %v748
      %v764 = vmul.f32 %v727, %v748
      %v765 = vmul.f32 %v728, %v748
      %v766 = vmul.f32 %v729, %v753
      %v767 = vmul.f32 %v730, %v753
      %v768 = vmul.f32 %v731, %v753
      %v769 = vmul.f32 %v732, %v758
      %v770 = vmul.f32 %v733, %v758
      %v771 = vmul.f32 %v734, %v758
      %784 = vrot.lane.b32.xlu0 %v760, 127
      %v785 = vpop.permute.xlu0 %784
      %786 = vrot.lane.b32.xlu0 %v761, 127
      %v787 = vpop.permute.xlu0 %786
      %788 = vrot.lane.b32.xlu0 %v762, 127
      %v789 = vpop.permute.xlu0 %788
      %790 = vrot.lane.b32.xlu0 %v763, 127
      %v791 = vpop.permute.xlu0 %790
      %792 = vrot.lane.b32.xlu0 %v764, 127
      %v793 = vpop.permute.xlu0 %792
      %794 = vrot.lane.b32.xlu0 %v765, 127
      %v795 = vpop.permute.xlu0 %794
      %796 = vrot.lane.b32.xlu0 %v766, 127
      %v797 = vpop.permute.xlu0 %796
      %798 = vrot.lane.b32.xlu0 %v767, 127
      %v799 = vpop.permute.xlu0 %798
      %800 = vrot.lane.b32.xlu0 %v768, 127
      %v801 = vpop.permute.xlu0 %800
      %802 = vrot.lane.b32.xlu0 %v769, 127
      %v803 = vpop.permute.xlu0 %802
      %804 = vrot.lane.b32.xlu0 %v770, 127
      %v805 = vpop.permute.xlu0 %804
      %806 = vrot.lane.b32.xlu0 %v771, 127
      %v807 = vpop.permute.xlu0 %806
      %vm808 = vcmask 1039360
      %v809 = vsel %vm808, %v785, %v787
      %v810 = vsel %vm808, %v787, %v789
      %v811 = vsel %vm808, %v791, %v793
      %v812 = vsel %vm808, %v793, %v795
      %v813 = vsel %vm808, %v797, %v799
      %v814 = vsel %vm808, %v799, %v801
      %v815 = vsel %vm808, %v803, %v805
      %v816 = vsel %vm808, %v805, %v807
      %v829 = vadd.f32 %v691, %v809
      %v830 = vadd.f32 %v692, %v810
      %v831 = vadd.f32 %v693, %v789
      %v832 = vadd.f32 %v694, %v811
      %v833 = vadd.f32 %v695, %v812
      %v834 = vadd.f32 %v696, %v795
      %v835 = vadd.f32 %v697, %v813
      %v836 = vadd.f32 %v698, %v814
      %v837 = vadd.f32 %v699, %v801
      %v838 = vadd.f32 %v700, %v815
      %v839 = vadd.f32 %v701, %v816
      %v840 = vadd.f32 %v702, %v807
      %s841 = scalar_lea.vmem %s1, 4
      %v842 = vld [vmem:[%s841] sm:$0x3]
      %v844 = vlaneseq
      %v845 = vshrl.u32 %v844, 7
      %v846 = vsub.s32 0, %v845
      %v847 = vrot.slane %v842, %v846
      %v848 = vlaneseq
      %v849 = vshrl.u32 %v848, 7
      %v850 = vsub.s32 1, %v849
      %v851 = vrot.slane %v842, %v850
      %852 = vrot.lane.b32.xlu0 %v847, 113
      %v853 = vpop.permute.xlu0 %852
      %854 = vrot.lane.b32.xlu0 %v851, 113
      %v855 = vpop.permute.xlu0 %854
      %vm856 = vcmask 924672
      %v857 = vsel %vm856, %v853, %v855
      %v861 = vmul.f32 %v612, %v853
      %v862 = vmul.f32 %v613, %v857
      %v863 = vmul.f32 %v614, %v855
      %v864 = vmul.f32 %v615, %v853
      %v865 = vmul.f32 %v616, %v857
      %v866 = vmul.f32 %v617, %v855
      %v867 = vmul.f32 %v618, %v853
      %v868 = vmul.f32 %v619, %v857
      %v869 = vmul.f32 %v620, %v855
      %v870 = vmul.f32 %v621, %v853
      %v871 = vmul.f32 %v622, %v857
      %v872 = vmul.f32 %v623, %v855
      %s873 = scalar_lea.vmem %s4, 64
      %v874 = vld [vmem:[%s873] sm:$0xff]
      %v875 = vld [vmem:[%s873 + $0x8] sm:$0xff]
      %v876 = vld [vmem:[%s873 + $0x10] sm:$0xff]
      %v877 = vld [vmem:[%s873 + $0x18] sm:$0xff]
      %879 = vset.pattern.permute.xlu0 0
      %880 = vperm.xlu0 %879, %v874
      %v881 = vpop.permute.xlu0 %880
      %884 = vset.pattern.permute.xlu0 0
      %885 = vperm.xlu0 %884, %v875
      %v886 = vpop.permute.xlu0 %885
      %889 = vset.pattern.permute.xlu0 0
      %890 = vperm.xlu0 %889, %v876
      %v891 = vpop.permute.xlu0 %890
      %894 = vset.pattern.permute.xlu0 0
      %895 = vperm.xlu0 %894, %v877
      %v896 = vpop.permute.xlu0 %895
      %v898 = vmul.f32 %v861, %v881
      %v899 = vmul.f32 %v862, %v881
      %v900 = vmul.f32 %v863, %v881
      %v901 = vmul.f32 %v864, %v886
      %v902 = vmul.f32 %v865, %v886
      %v903 = vmul.f32 %v866, %v886
      %v904 = vmul.f32 %v867, %v891
      %v905 = vmul.f32 %v868, %v891
      %v906 = vmul.f32 %v869, %v891
      %v907 = vmul.f32 %v870, %v896
      %v908 = vmul.f32 %v871, %v896
      %v909 = vmul.f32 %v872, %v896
      %922 = vrot.lane.b32.xlu0 %v898, 126
      %v923 = vpop.permute.xlu0 %922
      %924 = vrot.lane.b32.xlu0 %v899, 126
      %v925 = vpop.permute.xlu0 %924
      %926 = vrot.lane.b32.xlu0 %v900, 126
      %v927 = vpop.permute.xlu0 %926
      %928 = vrot.lane.b32.xlu0 %v901, 126
      %v929 = vpop.permute.xlu0 %928
      %930 = vrot.lane.b32.xlu0 %v902, 126
      %v931 = vpop.permute.xlu0 %930
      %932 = vrot.lane.b32.xlu0 %v903, 126
      %v933 = vpop.permute.xlu0 %932
      %934 = vrot.lane.b32.xlu0 %v904, 126
      %v935 = vpop.permute.xlu0 %934
      %936 = vrot.lane.b32.xlu0 %v905, 126
      %v937 = vpop.permute.xlu0 %936
      %938 = vrot.lane.b32.xlu0 %v906, 126
      %v939 = vpop.permute.xlu0 %938
      %940 = vrot.lane.b32.xlu0 %v907, 126
      %v941 = vpop.permute.xlu0 %940
      %942 = vrot.lane.b32.xlu0 %v908, 126
      %v943 = vpop.permute.xlu0 %942
      %944 = vrot.lane.b32.xlu0 %v909, 126
      %v945 = vpop.permute.xlu0 %944
      %vm946 = vcmask 1031168
      %v947 = vsel %vm946, %v923, %v925
      %v948 = vsel %vm946, %v925, %v927
      %v949 = vsel %vm946, %v929, %v931
      %v950 = vsel %vm946, %v931, %v933
      %v951 = vsel %vm946, %v935, %v937
      %v952 = vsel %vm946, %v937, %v939
      %v953 = vsel %vm946, %v941, %v943
      %v954 = vsel %vm946, %v943, %v945
      %v967 = vadd.f32 %v829, %v947
      %v968 = vadd.f32 %v830, %v948
      %v969 = vadd.f32 %v831, %v927
      %v970 = vadd.f32 %v832, %v949
      %v971 = vadd.f32 %v833, %v950
      %v972 = vadd.f32 %v834, %v933
      %v973 = vadd.f32 %v835, %v951
      %v974 = vadd.f32 %v836, %v952
      %v975 = vadd.f32 %v837, %v939
      %v976 = vadd.f32 %v838, %v953
      %v977 = vadd.f32 %v839, %v954
      %v978 = vadd.f32 %v840, %v945
      %s979 = scalar_lea.vmem %s1, 6
      %v980 = vld [vmem:[%s979] sm:$0x3]
      %v982 = vlaneseq
      %v983 = vshrl.u32 %v982, 7
      %v984 = vsub.s32 0, %v983
      %v985 = vrot.slane %v980, %v984
      %v986 = vlaneseq
      %v987 = vshrl.u32 %v986, 7
      %v988 = vsub.s32 1, %v987
      %v989 = vrot.slane %v980, %v988
      %990 = vrot.lane.b32.xlu0 %v985, 127
      %v991 = vpop.permute.xlu0 %990
      %992 = vrot.lane.b32.xlu0 %v989, 127
      %v993 = vpop.permute.xlu0 %992
      %v994 = vsel %vm808, %v991, %v993
      %v998 = vmul.f32 %v612, %v991
      %v999 = vmul.f32 %v613, %v994
      %v1000 = vmul.f32 %v614, %v993
      %v1001 = vmul.f32 %v615, %v991
      %v1002 = vmul.f32 %v616, %v994
      %v1003 = vmul.f32 %v617, %v993
      %v1004 = vmul.f32 %v618, %v991
      %v1005 = vmul.f32 %v619, %v994
      %v1006 = vmul.f32 %v620, %v993
      %v1007 = vmul.f32 %v621, %v991
      %v1008 = vmul.f32 %v622, %v994
      %v1009 = vmul.f32 %v623, %v993
      %s1010 = scalar_lea.vmem %s4, 96
      %v1011 = vld [vmem:[%s1010] sm:$0xff]
      %v1012 = vld [vmem:[%s1010 + $0x8] sm:$0xff]
      %v1013 = vld [vmem:[%s1010 + $0x10] sm:$0xff]
      %v1014 = vld [vmem:[%s1010 + $0x18] sm:$0xff]
      %1016 = vset.pattern.permute.xlu0 0
      %1017 = vperm.xlu0 %1016, %v1011
      %v1018 = vpop.permute.xlu0 %1017
      %1021 = vset.pattern.permute.xlu0 0
      %1022 = vperm.xlu0 %1021, %v1012
      %v1023 = vpop.permute.xlu0 %1022
      %1026 = vset.pattern.permute.xlu0 0
      %1027 = vperm.xlu0 %1026, %v1013
      %v1028 = vpop.permute.xlu0 %1027
      %1031 = vset.pattern.permute.xlu0 0
      %1032 = vperm.xlu0 %1031, %v1014
      %v1033 = vpop.permute.xlu0 %1032
      %v1035 = vmul.f32 %v998, %v1018
      %v1036 = vmul.f32 %v999, %v1018
      %v1037 = vmul.f32 %v1000, %v1018
      %v1038 = vmul.f32 %v1001, %v1023
      %v1039 = vmul.f32 %v1002, %v1023
      %v1040 = vmul.f32 %v1003, %v1023
      %v1041 = vmul.f32 %v1004, %v1028
      %v1042 = vmul.f32 %v1005, %v1028
      %v1043 = vmul.f32 %v1006, %v1028
      %v1044 = vmul.f32 %v1007, %v1033
      %v1045 = vmul.f32 %v1008, %v1033
      %v1046 = vmul.f32 %v1009, %v1033
      %1059 = vrot.lane.b32.xlu0 %v1035, 112
      %v1060 = vpop.permute.xlu0 %1059
      %1061 = vrot.lane.b32.xlu0 %v1036, 112
      %v1062 = vpop.permute.xlu0 %1061
      %1063 = vrot.lane.b32.xlu0 %v1037, 112
      %v1064 = vpop.permute.xlu0 %1063
      %1065 = vrot.lane.b32.xlu0 %v1038, 112
      %v1066 = vpop.permute.xlu0 %1065
      %1067 = vrot.lane.b32.xlu0 %v1039, 112
      %v1068 = vpop.permute.xlu0 %1067
      %1069 = vrot.lane.b32.xlu0 %v1040, 112
      %v1070 = vpop.permute.xlu0 %1069
      %1071 = vrot.lane.b32.xlu0 %v1041, 112
      %v1072 = vpop.permute.xlu0 %1071
      %1073 = vrot.lane.b32.xlu0 %v1042, 112
      %v1074 = vpop.permute.xlu0 %1073
      %1075 = vrot.lane.b32.xlu0 %v1043, 112
      %v1076 = vpop.permute.xlu0 %1075
      %1077 = vrot.lane.b32.xlu0 %v1044, 112
      %v1078 = vpop.permute.xlu0 %1077
      %1079 = vrot.lane.b32.xlu0 %v1045, 112
      %v1080 = vpop.permute.xlu0 %1079
      %1081 = vrot.lane.b32.xlu0 %v1046, 112
      %v1082 = vpop.permute.xlu0 %1081
      %v1083 = vsel %vm718, %v1060, %v1062
      %v1084 = vsel %vm718, %v1062, %v1064
      %v1085 = vsel %vm718, %v1066, %v1068
      %v1086 = vsel %vm718, %v1068, %v1070
      %v1087 = vsel %vm718, %v1072, %v1074
      %v1088 = vsel %vm718, %v1074, %v1076
      %v1089 = vsel %vm718, %v1078, %v1080
      %v1090 = vsel %vm718, %v1080, %v1082
      %v1103 = vadd.f32 %v967, %v1083
      %v1104 = vadd.f32 %v968, %v1084
      %v1105 = vadd.f32 %v969, %v1064
      %v1106 = vadd.f32 %v970, %v1085
      %v1107 = vadd.f32 %v971, %v1086
      %v1108 = vadd.f32 %v972, %v1070
      %v1109 = vadd.f32 %v973, %v1087
      %v1110 = vadd.f32 %v974, %v1088
      %v1111 = vadd.f32 %v975, %v1076
      %v1112 = vadd.f32 %v976, %v1089
      %v1113 = vadd.f32 %v977, %v1090
      %v1114 = vadd.f32 %v978, %v1082
      %s1115 = scalar_lea.vmem %s1, 8
      %v1116 = vld [vmem:[%s1115] sm:$0x3]
      %v1118 = vlaneseq
      %v1119 = vshrl.u32 %v1118, 7
      %v1120 = vsub.s32 0, %v1119
      %v1121 = vrot.slane %v1116, %v1120
      %v1122 = vlaneseq
      %v1123 = vshrl.u32 %v1122, 7
      %v1124 = vsub.s32 1, %v1123
      %v1125 = vrot.slane %v1116, %v1124
      %v1128 = vmul.f32 %v613, %v1121
      %v1129 = vmul.f32 %v614, %v1125
      %v1130 = vmul.f32 %v616, %v1121
      %v1131 = vmul.f32 %v617, %v1125
      %v1132 = vmul.f32 %v619, %v1121
      %v1133 = vmul.f32 %v620, %v1125
      %v1134 = vmul.f32 %v622, %v1121
      %v1135 = vmul.f32 %v623, %v1125
      %s1136 = scalar_lea.vmem %s4, 128
      %v1137 = vld [vmem:[%s1136] sm:$0xff]
      %v1138 = vld [vmem:[%s1136 + $0x8] sm:$0xff]
      %v1139 = vld [vmem:[%s1136 + $0x10] sm:$0xff]
      %v1140 = vld [vmem:[%s1136 + $0x18] sm:$0xff]
      %1142 = vset.pattern.permute.xlu0 0
      %1143 = vperm.xlu0 %1142, %v1137
      %v1144 = vpop.permute.xlu0 %1143
      %1147 = vset.pattern.permute.xlu0 0
      %1148 = vperm.xlu0 %1147, %v1138
      %v1149 = vpop.permute.xlu0 %1148
      %1152 = vset.pattern.permute.xlu0 0
      %1153 = vperm.xlu0 %1152, %v1139
      %v1154 = vpop.permute.xlu0 %1153
      %1157 = vset.pattern.permute.xlu0 0
      %1158 = vperm.xlu0 %1157, %v1140
      %v1159 = vpop.permute.xlu0 %1158
      %v1161 = vmul.f32 %v1128, %v1144
      %v1162 = vmul.f32 %v1129, %v1144
      %v1163 = vmul.f32 %v1130, %v1149
      %v1164 = vmul.f32 %v1131, %v1149
      %v1165 = vmul.f32 %v1132, %v1154
      %v1166 = vmul.f32 %v1133, %v1154
      %v1167 = vmul.f32 %v1134, %v1159
      %v1168 = vmul.f32 %v1135, %v1159
      %1177 = vrot.lane.b32.xlu0 %v1161, 111
      %v1178 = vpop.permute.xlu0 %1177
      %1179 = vrot.lane.b32.xlu0 %v1162, 111
      %v1180 = vpop.permute.xlu0 %1179
      %1181 = vrot.lane.b32.xlu0 %v1163, 111
      %v1182 = vpop.permute.xlu0 %1181
      %1183 = vrot.lane.b32.xlu0 %v1164, 111
      %v1184 = vpop.permute.xlu0 %1183
      %1185 = vrot.lane.b32.xlu0 %v1165, 111
      %v1186 = vpop.permute.xlu0 %1185
      %1187 = vrot.lane.b32.xlu0 %v1166, 111
      %v1188 = vpop.permute.xlu0 %1187
      %1189 = vrot.lane.b32.xlu0 %v1167, 111
      %v1190 = vpop.permute.xlu0 %1189
      %1191 = vrot.lane.b32.xlu0 %v1168, 111
      %v1192 = vpop.permute.xlu0 %1191
      %v1193 = vsel %vm638, %v1178, %v1180
      %v1194 = vsel %vm638, %v1182, %v1184
      %v1195 = vsel %vm638, %v1186, %v1188
      %v1196 = vsel %vm638, %v1190, %v1192
      %v1209 = vadd.f32 %v1103, %v1178
      %v1210 = vadd.f32 %v1104, %v1193
      %v1211 = vadd.f32 %v1105, %v1180
      %v1212 = vadd.f32 %v1106, %v1182
      %v1213 = vadd.f32 %v1107, %v1194
      %v1214 = vadd.f32 %v1108, %v1184
      %v1215 = vadd.f32 %v1109, %v1186
      %v1216 = vadd.f32 %v1110, %v1195
      %v1217 = vadd.f32 %v1111, %v1188
      %v1218 = vadd.f32 %v1112, %v1190
      %v1219 = vadd.f32 %v1113, %v1196
      %v1220 = vadd.f32 %v1114, %v1192
      %v1221 = vld [vmem:[#allocation2 + $0x8] sm:$0xff]
      %v1222 = vld [vmem:[#allocation2 + $0x10] sm:$0xff]
      %v1223 = vld [vmem:[#allocation2 + $0x18] sm:$0xff]
      %v1224 = vld [vmem:[#allocation2 + $0x28] sm:$0xff]
      %v1225 = vld [vmem:[#allocation2 + $0x30] sm:$0xff]
      %v1226 = vld [vmem:[#allocation2 + $0x38] sm:$0xff]
      %v1227 = vld [vmem:[#allocation2 + $0x48] sm:$0xff]
      %v1228 = vld [vmem:[#allocation2 + $0x50] sm:$0xff]
      %v1229 = vld [vmem:[#allocation2 + $0x58] sm:$0xff]
      %v1230 = vld [vmem:[#allocation2 + $0x68] sm:$0xff]
      %v1231 = vld [vmem:[#allocation2 + $0x70] sm:$0xff]
      %v1232 = vld [vmem:[#allocation2 + $0x78] sm:$0xff]
      %s1233 = scalar_lea.vmem %s1, 10
      %v1234 = vld [vmem:[%s1233] sm:$0x3]
      %v1236 = vlaneseq
      %v1237 = vshrl.u32 %v1236, 7
      %v1238 = vsub.s32 0, %v1237
      %v1239 = vrot.slane %v1234, %v1238
      %v1240 = vlaneseq
      %v1241 = vshrl.u32 %v1240, 7
      %v1242 = vsub.s32 1, %v1241
      %v1243 = vrot.slane %v1234, %v1242
      %1244 = vrot.lane.b32.xlu0 %v1239, 1
      %v1245 = vpop.permute.xlu0 %1244
      %1246 = vrot.lane.b32.xlu0 %v1243, 1
      %v1247 = vpop.permute.xlu0 %1246
      %vm1248 = vcmask 7168
      %v1249 = vsel %vm1248, %v1245, %v1247
      %v1253 = vmul.f32 %v1221, %v1245
      %v1254 = vmul.f32 %v1222, %v1249
      %v1255 = vmul.f32 %v1223, %v1247
      %v1256 = vmul.f32 %v1224, %v1245
      %v1257 = vmul.f32 %v1225, %v1249
      %v1258 = vmul.f32 %v1226, %v1247
      %v1259 = vmul.f32 %v1227, %v1245
      %v1260 = vmul.f32 %v1228, %v1249
      %v1261 = vmul.f32 %v1229, %v1247
      %v1262 = vmul.f32 %v1230, %v1245
      %v1263 = vmul.f32 %v1231, %v1249
      %v1264 = vmul.f32 %v1232, %v1247
      %s1265 = scalar_lea.vmem %s4, 160
      %v1266 = vld [vmem:[%s1265] sm:$0xff]
      %v1267 = vld [vmem:[%s1265 + $0x8] sm:$0xff]
      %v1268 = vld [vmem:[%s1265 + $0x10] sm:$0xff]
      %v1269 = vld [vmem:[%s1265 + $0x18] sm:$0xff]
      %1271 = vset.pattern.permute.xlu0 0
      %1272 = vperm.xlu0 %1271, %v1266
      %v1273 = vpop.permute.xlu0 %1272
      %1276 = vset.pattern.permute.xlu0 0
      %1277 = vperm.xlu0 %1276, %v1267
      %v1278 = vpop.permute.xlu0 %1277
      %1281 = vset.pattern.permute.xlu0 0
      %1282 = vperm.xlu0 %1281, %v1268
      %v1283 = vpop.permute.xlu0 %1282
      %1286 = vset.pattern.permute.xlu0 0
      %1287 = vperm.xlu0 %1286, %v1269
      %v1288 = vpop.permute.xlu0 %1287
      %v1290 = vmul.f32 %v1253, %v1273
      %v1291 = vmul.f32 %v1254, %v1273
      %v1292 = vmul.f32 %v1255, %v1273
      %v1293 = vmul.f32 %v1256, %v1278
      %v1294 = vmul.f32 %v1257, %v1278
      %v1295 = vmul.f32 %v1258, %v1278
      %v1296 = vmul.f32 %v1259, %v1283
      %v1297 = vmul.f32 %v1260, %v1283
      %v1298 = vmul.f32 %v1261, %v1283
      %v1299 = vmul.f32 %v1262, %v1288
      %v1300 = vmul.f32 %v1263, %v1288
      %v1301 = vmul.f32 %v1264, %v1288
      %1314 = vrot.lane.b32.xlu0 %v1290, 110
      %v1315 = vpop.permute.xlu0 %1314
      %1316 = vrot.lane.b32.xlu0 %v1291, 110
      %v1317 = vpop.permute.xlu0 %1316
      %1318 = vrot.lane.b32.xlu0 %v1292, 110
      %v1319 = vpop.permute.xlu0 %1318
      %1320 = vrot.lane.b32.xlu0 %v1293, 110
      %v1321 = vpop.permute.xlu0 %1320
      %1322 = vrot.lane.b32.xlu0 %v1294, 110
      %v1323 = vpop.permute.xlu0 %1322
      %1324 = vrot.lane.b32.xlu0 %v1295, 110
      %v1325 = vpop.permute.xlu0 %1324
      %1326 = vrot.lane.b32.xlu0 %v1296, 110
      %v1327 = vpop.permute.xlu0 %1326
      %1328 = vrot.lane.b32.xlu0 %v1297, 110
      %v1329 = vpop.permute.xlu0 %1328
      %1330 = vrot.lane.b32.xlu0 %v1298, 110
      %v1331 = vpop.permute.xlu0 %1330
      %1332 = vrot.lane.b32.xlu0 %v1299, 110
      %v1333 = vpop.permute.xlu0 %1332
      %1334 = vrot.lane.b32.xlu0 %v1300, 110
      %v1335 = vpop.permute.xlu0 %1334
      %1336 = vrot.lane.b32.xlu0 %v1301, 110
      %v1337 = vpop.permute.xlu0 %1336
      %vm1338 = vcmask 900096
      %v1339 = vsel %vm1338, %v1315, %v1317
      %v1340 = vsel %vm1338, %v1317, %v1319
      %v1341 = vsel %vm1338, %v1321, %v1323
      %v1342 = vsel %vm1338, %v1323, %v1325
      %v1343 = vsel %vm1338, %v1327, %v1329
      %v1344 = vsel %vm1338, %v1329, %v1331
      %v1345 = vsel %vm1338, %v1333, %v1335
      %v1346 = vsel %vm1338, %v1335, %v1337
      %v1359 = vadd.f32 %v1209, %v1315
      %v1360 = vadd.f32 %v1210, %v1339
      %v1361 = vadd.f32 %v1211, %v1340
      %v1362 = vadd.f32 %v1212, %v1321
      %v1363 = vadd.f32 %v1213, %v1341
      %v1364 = vadd.f32 %v1214, %v1342
      %v1365 = vadd.f32 %v1215, %v1327
      %v1366 = vadd.f32 %v1216, %v1343
      %v1367 = vadd.f32 %v1217, %v1344
      %v1368 = vadd.f32 %v1218, %v1333
      %v1369 = vadd.f32 %v1219, %v1345
      %v1370 = vadd.f32 %v1220, %v1346
      %s1371 = scalar_lea.vmem %s1, 12
      %v1372 = vld [vmem:[%s1371] sm:$0x3]
      %v1374 = vlaneseq
      %v1375 = vshrl.u32 %v1374, 7
      %v1376 = vsub.s32 0, %v1375
      %v1377 = vrot.slane %v1372, %v1376
      %v1378 = vlaneseq
      %v1379 = vshrl.u32 %v1378, 7
      %v1380 = vsub.s32 1, %v1379
      %v1381 = vrot.slane %v1372, %v1380
      %1382 = vrot.lane.b32.xlu0 %v1377, 15
      %v1383 = vpop.permute.xlu0 %1382
      %1384 = vrot.lane.b32.xlu0 %v1381, 15
      %v1385 = vpop.permute.xlu0 %1384
      %vm1386 = vcmask 121856
      %v1387 = vsel %vm1386, %v1383, %v1385
      %v1391 = vmul.f32 %v1221, %v1383
      %v1392 = vmul.f32 %v1222, %v1387
      %v1393 = vmul.f32 %v1223, %v1385
      %v1394 = vmul.f32 %v1224, %v1383
      %v1395 = vmul.f32 %v1225, %v1387
      %v1396 = vmul.f32 %v1226, %v1385
      %v1397 = vmul.f32 %v1227, %v1383
      %v1398 = vmul.f32 %v1228, %v1387
      %v1399 = vmul.f32 %v1229, %v1385
      %v1400 = vmul.f32 %v1230, %v1383
      %v1401 = vmul.f32 %v1231, %v1387
      %v1402 = vmul.f32 %v1232, %v1385
      %s1403 = scalar_lea.vmem %s4, 192
      %v1404 = vld [vmem:[%s1403] sm:$0xff]
      %v1405 = vld [vmem:[%s1403 + $0x8] sm:$0xff]
      %v1406 = vld [vmem:[%s1403 + $0x10] sm:$0xff]
      %v1407 = vld [vmem:[%s1403 + $0x18] sm:$0xff]
      %1409 = vset.pattern.permute.xlu0 0
      %1410 = vperm.xlu0 %1409, %v1404
      %v1411 = vpop.permute.xlu0 %1410
      %1414 = vset.pattern.permute.xlu0 0
      %1415 = vperm.xlu0 %1414, %v1405
      %v1416 = vpop.permute.xlu0 %1415
      %1419 = vset.pattern.permute.xlu0 0
      %1420 = vperm.xlu0 %1419, %v1406
      %v1421 = vpop.permute.xlu0 %1420
      %1424 = vset.pattern.permute.xlu0 0
      %1425 = vperm.xlu0 %1424, %v1407
      %v1426 = vpop.permute.xlu0 %1425
      %v1428 = vmul.f32 %v1391, %v1411
      %v1429 = vmul.f32 %v1392, %v1411
      %v1430 = vmul.f32 %v1393, %v1411
      %v1431 = vmul.f32 %v1394, %v1416
      %v1432 = vmul.f32 %v1395, %v1416
      %v1433 = vmul.f32 %v1396, %v1416
      %v1434 = vmul.f32 %v1397, %v1421
      %v1435 = vmul.f32 %v1398, %v1421
      %v1436 = vmul.f32 %v1399, %v1421
      %v1437 = vmul.f32 %v1400, %v1426
      %v1438 = vmul.f32 %v1401, %v1426
      %v1439 = vmul.f32 %v1402, %v1426
      %1452 = vrot.lane.b32.xlu0 %v1428, 96
      %v1453 = vpop.permute.xlu0 %1452
      %1454 = vrot.lane.b32.xlu0 %v1429, 96
      %v1455 = vpop.permute.xlu0 %1454
      %1456 = vrot.lane.b32.xlu0 %v1430, 96
      %v1457 = vpop.permute.xlu0 %1456
      %1458 = vrot.lane.b32.xlu0 %v1431, 96
      %v1459 = vpop.permute.xlu0 %1458
      %1460 = vrot.lane.b32.xlu0 %v1432, 96
      %v1461 = vpop.permute.xlu0 %1460
      %1462 = vrot.lane.b32.xlu0 %v1433, 96
      %v1463 = vpop.permute.xlu0 %1462
      %1464 = vrot.lane.b32.xlu0 %v1434, 96
      %v1465 = vpop.permute.xlu0 %1464
      %1466 = vrot.lane.b32.xlu0 %v1435, 96
      %v1467 = vpop.permute.xlu0 %1466
      %1468 = vrot.lane.b32.xlu0 %v1436, 96
      %v1469 = vpop.permute.xlu0 %1468
      %1470 = vrot.lane.b32.xlu0 %v1437, 96
      %v1471 = vpop.permute.xlu0 %1470
      %1472 = vrot.lane.b32.xlu0 %v1438, 96
      %v1473 = vpop.permute.xlu0 %1472
      %1474 = vrot.lane.b32.xlu0 %v1439, 96
      %v1475 = vpop.permute.xlu0 %1474
      %vm1476 = vcmask 785408
      %v1477 = vsel %vm1476, %v1453, %v1455
      %v1478 = vsel %vm1476, %v1455, %v1457
      %v1479 = vsel %vm1476, %v1459, %v1461
      %v1480 = vsel %vm1476, %v1461, %v1463
      %v1481 = vsel %vm1476, %v1465, %v1467
      %v1482 = vsel %vm1476, %v1467, %v1469
      %v1483 = vsel %vm1476, %v1471, %v1473
      %v1484 = vsel %vm1476, %v1473, %v1475
      %v1497 = vadd.f32 %v1359, %v1453
      %v1498 = vadd.f32 %v1360, %v1477
      %v1499 = vadd.f32 %v1361, %v1478
      %v1500 = vadd.f32 %v1362, %v1459
      %v1501 = vadd.f32 %v1363, %v1479
      %v1502 = vadd.f32 %v1364, %v1480
      %v1503 = vadd.f32 %v1365, %v1465
      %v1504 = vadd.f32 %v1366, %v1481
      %v1505 = vadd.f32 %v1367, %v1482
      %v1506 = vadd.f32 %v1368, %v1471
      %v1507 = vadd.f32 %v1369, %v1483
      %v1508 = vadd.f32 %v1370, %v1484
      %s1509 = scalar_lea.vmem %s1, 14
      %v1510 = vld [vmem:[%s1509] sm:$0x3]
      %v1512 = vlaneseq
      %v1513 = vshrl.u32 %v1512, 7
      %v1514 = vsub.s32 0, %v1513
      %v1515 = vrot.slane %v1510, %v1514
      %v1516 = vlaneseq
      %v1517 = vshrl.u32 %v1516, 7
      %v1518 = vsub.s32 1, %v1517
      %v1519 = vrot.slane %v1510, %v1518
      %1520 = vrot.lane.b32.xlu0 %v1515, 16
      %v1521 = vpop.permute.xlu0 %1520
      %1522 = vrot.lane.b32.xlu0 %v1519, 16
      %v1523 = vpop.permute.xlu0 %1522
      %v1524 = vsel %vm446, %v1521, %v1523
      %v1528 = vmul.f32 %v1221, %v1521
      %v1529 = vmul.f32 %v1222, %v1524
      %v1530 = vmul.f32 %v1223, %v1523
      %v1531 = vmul.f32 %v1224, %v1521
      %v1532 = vmul.f32 %v1225, %v1524
      %v1533 = vmul.f32 %v1226, %v1523
      %v1534 = vmul.f32 %v1227, %v1521
      %v1535 = vmul.f32 %v1228, %v1524
      %v1536 = vmul.f32 %v1229, %v1523
      %v1537 = vmul.f32 %v1230, %v1521
      %v1538 = vmul.f32 %v1231, %v1524
      %v1539 = vmul.f32 %v1232, %v1523
      %s1540 = scalar_lea.vmem %s4, 224
      %v1541 = vld [vmem:[%s1540] sm:$0xff]
      %v1542 = vld [vmem:[%s1540 + $0x8] sm:$0xff]
      %v1543 = vld [vmem:[%s1540 + $0x10] sm:$0xff]
      %v1544 = vld [vmem:[%s1540 + $0x18] sm:$0xff]
      %1546 = vset.pattern.permute.xlu0 0
      %1547 = vperm.xlu0 %1546, %v1541
      %v1548 = vpop.permute.xlu0 %1547
      %1551 = vset.pattern.permute.xlu0 0
      %1552 = vperm.xlu0 %1551, %v1542
      %v1553 = vpop.permute.xlu0 %1552
      %1556 = vset.pattern.permute.xlu0 0
      %1557 = vperm.xlu0 %1556, %v1543
      %v1558 = vpop.permute.xlu0 %1557
      %1561 = vset.pattern.permute.xlu0 0
      %1562 = vperm.xlu0 %1561, %v1544
      %v1563 = vpop.permute.xlu0 %1562
      %v1565 = vmul.f32 %v1528, %v1548
      %v1566 = vmul.f32 %v1529, %v1548
      %v1567 = vmul.f32 %v1530, %v1548
      %v1568 = vmul.f32 %v1531, %v1553
      %v1569 = vmul.f32 %v1532, %v1553
      %v1570 = vmul.f32 %v1533, %v1553
      %v1571 = vmul.f32 %v1534, %v1558
      %v1572 = vmul.f32 %v1535, %v1558
      %v1573 = vmul.f32 %v1536, %v1558
      %v1574 = vmul.f32 %v1537, %v1563
      %v1575 = vmul.f32 %v1538, %v1563
      %v1576 = vmul.f32 %v1539, %v1563
      %1589 = vrot.lane.b32.xlu0 %v1565, 95
      %v1590 = vpop.permute.xlu0 %1589
      %1591 = vrot.lane.b32.xlu0 %v1566, 95
      %v1592 = vpop.permute.xlu0 %1591
      %1593 = vrot.lane.b32.xlu0 %v1567, 95
      %v1594 = vpop.permute.xlu0 %1593
      %1595 = vrot.lane.b32.xlu0 %v1568, 95
      %v1596 = vpop.permute.xlu0 %1595
      %1597 = vrot.lane.b32.xlu0 %v1569, 95
      %v1598 = vpop.permute.xlu0 %1597
      %1599 = vrot.lane.b32.xlu0 %v1570, 95
      %v1600 = vpop.permute.xlu0 %1599
      %1601 = vrot.lane.b32.xlu0 %v1571, 95
      %v1602 = vpop.permute.xlu0 %1601
      %1603 = vrot.lane.b32.xlu0 %v1572, 95
      %v1604 = vpop.permute.xlu0 %1603
      %1605 = vrot.lane.b32.xlu0 %v1573, 95
      %v1606 = vpop.permute.xlu0 %1605
      %1607 = vrot.lane.b32.xlu0 %v1574, 95
      %v1608 = vpop.permute.xlu0 %1607
      %1609 = vrot.lane.b32.xlu0 %v1575, 95
      %v1610 = vpop.permute.xlu0 %1609
      %1611 = vrot.lane.b32.xlu0 %v1576, 95
      %v1612 = vpop.permute.xlu0 %1611
      %vm1613 = vcmask 777216
      %v1614 = vsel %vm1613, %v1590, %v1592
      %v1615 = vsel %vm1613, %v1592, %v1594
      %v1616 = vsel %vm1613, %v1596, %v1598
      %v1617 = vsel %vm1613, %v1598, %v1600
      %v1618 = vsel %vm1613, %v1602, %v1604
      %v1619 = vsel %vm1613, %v1604, %v1606
      %v1620 = vsel %vm1613, %v1608, %v1610
      %v1621 = vsel %vm1613, %v1610, %v1612
      %v1634 = vadd.f32 %v1497, %v1590
      %v1635 = vadd.f32 %v1498, %v1614
      %v1636 = vadd.f32 %v1499, %v1615
      %v1637 = vadd.f32 %v1500, %v1596
      %v1638 = vadd.f32 %v1501, %v1616
      %v1639 = vadd.f32 %v1502, %v1617
      %v1640 = vadd.f32 %v1503, %v1602
      %v1641 = vadd.f32 %v1504, %v1618
      %v1642 = vadd.f32 %v1505, %v1619
      %v1643 = vadd.f32 %v1506, %v1608
      %v1644 = vadd.f32 %v1507, %v1620
      %v1645 = vadd.f32 %v1508, %v1621
      %s1646 = scalar_lea.vmem %s1, 16
      %v1647 = vld [vmem:[%s1646] sm:$0x3]
      %v1649 = vlaneseq
      %v1650 = vshrl.u32 %v1649, 7
      %v1651 = vsub.s32 0, %v1650
      %v1652 = vrot.slane %v1647, %v1651
      %v1653 = vlaneseq
      %v1654 = vshrl.u32 %v1653, 7
      %v1655 = vsub.s32 1, %v1654
      %v1656 = vrot.slane %v1647, %v1655
      %1657 = vrot.lane.b32.xlu0 %v1652, 17
      %v1658 = vpop.permute.xlu0 %1657
      %1659 = vrot.lane.b32.xlu0 %v1656, 17
      %v1660 = vpop.permute.xlu0 %1659
      %vm1661 = vcmask 138240
      %v1662 = vsel %vm1661, %v1658, %v1660
      %v1666 = vmul.f32 %v1221, %v1658
      %v1667 = vmul.f32 %v1222, %v1662
      %v1668 = vmul.f32 %v1223, %v1660
      %v1669 = vmul.f32 %v1224, %v1658
      %v1670 = vmul.f32 %v1225, %v1662
      %v1671 = vmul.f32 %v1226, %v1660
      %v1672 = vmul.f32 %v1227, %v1658
      %v1673 = vmul.f32 %v1228, %v1662
      %v1674 = vmul.f32 %v1229, %v1660
      %v1675 = vmul.f32 %v1230, %v1658
      %v1676 = vmul.f32 %v1231, %v1662
      %v1677 = vmul.f32 %v1232, %v1660
      %s1678 = scalar_lea.vmem %s4, 256
      %v1679 = vld [vmem:[%s1678] sm:$0xff]
      %v1680 = vld [vmem:[%s1678 + $0x8] sm:$0xff]
      %v1681 = vld [vmem:[%s1678 + $0x10] sm:$0xff]
      %v1682 = vld [vmem:[%s1678 + $0x18] sm:$0xff]
      %1684 = vset.pattern.permute.xlu0 0
      %1685 = vperm.xlu0 %1684, %v1679
      %v1686 = vpop.permute.xlu0 %1685
      %1689 = vset.pattern.permute.xlu0 0
      %1690 = vperm.xlu0 %1689, %v1680
      %v1691 = vpop.permute.xlu0 %1690
      %1694 = vset.pattern.permute.xlu0 0
      %1695 = vperm.xlu0 %1694, %v1681
      %v1696 = vpop.permute.xlu0 %1695
      %1699 = vset.pattern.permute.xlu0 0
      %1700 = vperm.xlu0 %1699, %v1682
      %v1701 = vpop.permute.xlu0 %1700
      %v1703 = vmul.f32 %v1666, %v1686
      %v1704 = vmul.f32 %v1667, %v1686
      %v1705 = vmul.f32 %v1668, %v1686
      %v1706 = vmul.f32 %v1669, %v1691
      %v1707 = vmul.f32 %v1670, %v1691
      %v1708 = vmul.f32 %v1671, %v1691
      %v1709 = vmul.f32 %v1672, %v1696
      %v1710 = vmul.f32 %v1673, %v1696
      %v1711 = vmul.f32 %v1674, %v1696
      %v1712 = vmul.f32 %v1675, %v1701
      %v1713 = vmul.f32 %v1676, %v1701
      %v1714 = vmul.f32 %v1677, %v1701
      %1727 = vrot.lane.b32.xlu0 %v1703, 94
      %v1728 = vpop.permute.xlu0 %1727
      %1729 = vrot.lane.b32.xlu0 %v1704, 94
      %v1730 = vpop.permute.xlu0 %1729
      %1731 = vrot.lane.b32.xlu0 %v1705, 94
      %v1732 = vpop.permute.xlu0 %1731
      %1733 = vrot.lane.b32.xlu0 %v1706, 94
      %v1734 = vpop.permute.xlu0 %1733
      %1735 = vrot.lane.b32.xlu0 %v1707, 94
      %v1736 = vpop.permute.xlu0 %1735
      %1737 = vrot.lane.b32.xlu0 %v1708, 94
      %v1738 = vpop.permute.xlu0 %1737
      %1739 = vrot.lane.b32.xlu0 %v1709, 94
      %v1740 = vpop.permute.xlu0 %1739
      %1741 = vrot.lane.b32.xlu0 %v1710, 94
      %v1742 = vpop.permute.xlu0 %1741
      %1743 = vrot.lane.b32.xlu0 %v1711, 94
      %v1744 = vpop.permute.xlu0 %1743
      %1745 = vrot.lane.b32.xlu0 %v1712, 94
      %v1746 = vpop.permute.xlu0 %1745
      %1747 = vrot.lane.b32.xlu0 %v1713, 94
      %v1748 = vpop.permute.xlu0 %1747
      %1749 = vrot.lane.b32.xlu0 %v1714, 94
      %v1750 = vpop.permute.xlu0 %1749
      %vm1751 = vcmask 769024
      %v1752 = vsel %vm1751, %v1728, %v1730
      %v1753 = vsel %vm1751, %v1730, %v1732
      %v1754 = vsel %vm1751, %v1734, %v1736
      %v1755 = vsel %vm1751, %v1736, %v1738
      %v1756 = vsel %vm1751, %v1740, %v1742
      %v1757 = vsel %vm1751, %v1742, %v1744
      %v1758 = vsel %vm1751, %v1746, %v1748
      %v1759 = vsel %vm1751, %v1748, %v1750
      %v1772 = vadd.f32 %v1634, %v1728
      %v1773 = vadd.f32 %v1635, %v1752
      %v1774 = vadd.f32 %v1636, %v1753
      %v1775 = vadd.f32 %v1637, %v1734
      %v1776 = vadd.f32 %v1638, %v1754
      %v1777 = vadd.f32 %v1639, %v1755
      %v1778 = vadd.f32 %v1640, %v1740
      %v1779 = vadd.f32 %v1641, %v1756
      %v1780 = vadd.f32 %v1642, %v1757
      %v1781 = vadd.f32 %v1643, %v1746
      %v1782 = vadd.f32 %v1644, %v1758
      %v1783 = vadd.f32 %v1645, %v1759
      %v1784 = vld [vmem:[%s5] sm:$0xff]
      %v1785 = vld [vmem:[%s5 + $0x8] sm:$0xff]
      %v1786 = vld [vmem:[%s5 + $0x10] sm:$0xff]
      %v1787 = vld [vmem:[%s5 + $0x18] sm:$0xff]
      %1789 = vset.pattern.permute.xlu0 0
      %1790 = vperm.xlu0 %1789, %v1784
      %v1791 = vpop.permute.xlu0 %1790
      %1794 = vset.pattern.permute.xlu0 0
      %1795 = vperm.xlu0 %1794, %v1785
      %v1796 = vpop.permute.xlu0 %1795
      %1799 = vset.pattern.permute.xlu0 0
      %1800 = vperm.xlu0 %1799, %v1786
      %v1801 = vpop.permute.xlu0 %1800
      %1804 = vset.pattern.permute.xlu0 0
      %1805 = vperm.xlu0 %1804, %v1787
      %v1806 = vpop.permute.xlu0 %1805
      %v1808 = vadd.f32 %v1772, %v1791
      %v1809 = vadd.f32 %v1773, %v1791
      %v1810 = vadd.f32 %v1774, %v1791
      %v1811 = vadd.f32 %v1775, %v1796
      %v1812 = vadd.f32 %v1776, %v1796
      %v1813 = vadd.f32 %v1777, %v1796
      %v1814 = vadd.f32 %v1778, %v1801
      %v1815 = vadd.f32 %v1779, %v1801
      %v1816 = vadd.f32 %v1780, %v1801
      %v1817 = vadd.f32 %v1781, %v1806
      %v1818 = vadd.f32 %v1782, %v1806
      %v1819 = vadd.f32 %v1783, %v1806
      %v1820 = vadd.f32 %v1808, 3.0
      %v1821 = vadd.f32 %v1809, 3.0
      %v1822 = vadd.f32 %v1810, 3.0
      %v1823 = vadd.f32 %v1811, 3.0
      %v1824 = vadd.f32 %v1812, 3.0
      %v1825 = vadd.f32 %v1813, 3.0
      %v1826 = vadd.f32 %v1814, 3.0
      %v1827 = vadd.f32 %v1815, 3.0
      %v1828 = vadd.f32 %v1816, 3.0
      %v1829 = vadd.f32 %v1817, 3.0
      %v1830 = vadd.f32 %v1818, 3.0
      %v1831 = vadd.f32 %v1819, 3.0
      %v1832 = vmax.f32 %v1820, 0.0
      %v1833 = vmax.f32 %v1821, 0.0
      %v1834 = vmax.f32 %v1822, 0.0
      %v1835 = vmax.f32 %v1823, 0.0
      %v1836 = vmax.f32 %v1824, 0.0
      %v1837 = vmax.f32 %v1825, 0.0
      %v1838 = vmax.f32 %v1826, 0.0
      %v1839 = vmax.f32 %v1827, 0.0
      %v1840 = vmax.f32 %v1828, 0.0
      %v1841 = vmax.f32 %v1829, 0.0
      %v1842 = vmax.f32 %v1830, 0.0
      %v1843 = vmax.f32 %v1831, 0.0
      %v1844 = vmin.f32 %v1832, 6.0
      %v1845 = vmin.f32 %v1833, 6.0
      %v1846 = vmin.f32 %v1834, 6.0
      %v1847 = vmin.f32 %v1835, 6.0
      %v1848 = vmin.f32 %v1836, 6.0
      %v1849 = vmin.f32 %v1837, 6.0
      %v1850 = vmin.f32 %v1838, 6.0
      %v1851 = vmin.f32 %v1839, 6.0
      %v1852 = vmin.f32 %v1840, 6.0
      %v1853 = vmin.f32 %v1841, 6.0
      %v1854 = vmin.f32 %v1842, 6.0
      %v1855 = vmin.f32 %v1843, 6.0
      %v1856 = vmul.f32 %v1808, %v1844
      %v1857 = vmul.f32 %v1809, %v1845
      %v1858 = vmul.f32 %v1810, %v1846
      %v1859 = vmul.f32 %v1811, %v1847
      %v1860 = vmul.f32 %v1812, %v1848
      %v1861 = vmul.f32 %v1813, %v1849
      %v1862 = vmul.f32 %v1814, %v1850
      %v1863 = vmul.f32 %v1815, %v1851
      %v1864 = vmul.f32 %v1816, %v1852
      %v1865 = vmul.f32 %v1817, %v1853
      %v1866 = vmul.f32 %v1818, %v1854
      %v1867 = vmul.f32 %v1819, %v1855
      %v1868 = vmul.f32 %v1856, 0.16666667
      %v1869 = vmul.f32 %v1857, 0.16666667
      %v1870 = vmul.f32 %v1858, 0.16666667
      %v1871 = vmul.f32 %v1859, 0.16666667
      %v1872 = vmul.f32 %v1860, 0.16666667
      %v1873 = vmul.f32 %v1861, 0.16666667
      %v1874 = vmul.f32 %v1862, 0.16666667
      %v1875 = vmul.f32 %v1863, 0.16666667
      %v1876 = vmul.f32 %v1864, 0.16666667
      %v1877 = vmul.f32 %v1865, 0.16666667
      %v1878 = vmul.f32 %v1866, 0.16666667
      %v1879 = vmul.f32 %v1867, 0.16666667
      %1892 = vrot.lane.b32.xlu0 %v1868, 17
      %v1893 = vpop.permute.xlu0 %1892
      %1894 = vrot.lane.b32.xlu0 %v1869, 17
      %v1895 = vpop.permute.xlu0 %1894
      %1896 = vrot.lane.b32.xlu0 %v1870, 17
      %v1897 = vpop.permute.xlu0 %1896
      %1898 = vrot.lane.b32.xlu0 %v1871, 17
      %v1899 = vpop.permute.xlu0 %1898
      %1900 = vrot.lane.b32.xlu0 %v1872, 17
      %v1901 = vpop.permute.xlu0 %1900
      %1902 = vrot.lane.b32.xlu0 %v1873, 17
      %v1903 = vpop.permute.xlu0 %1902
      %1904 = vrot.lane.b32.xlu0 %v1874, 17
      %v1905 = vpop.permute.xlu0 %1904
      %1906 = vrot.lane.b32.xlu0 %v1875, 17
      %v1907 = vpop.permute.xlu0 %1906
      %1908 = vrot.lane.b32.xlu0 %v1876, 17
      %v1909 = vpop.permute.xlu0 %1908
      %1910 = vrot.lane.b32.xlu0 %v1877, 17
      %v1911 = vpop.permute.xlu0 %1910
      %1912 = vrot.lane.b32.xlu0 %v1878, 17
      %v1913 = vpop.permute.xlu0 %1912
      %1914 = vrot.lane.b32.xlu0 %v1879, 17
      %v1915 = vpop.permute.xlu0 %1914
      %v1916 = vsel %vm1661, %v1893, %v1895
      %v1917 = vsel %vm1661, %v1895, %v1897
      %v1918 = vsel %vm1661, %v1899, %v1901
      %v1919 = vsel %vm1661, %v1901, %v1903
      %v1920 = vsel %vm1661, %v1905, %v1907
      %v1921 = vsel %vm1661, %v1907, %v1909
      %v1922 = vsel %vm1661, %v1911, %v1913
      %v1923 = vsel %vm1661, %v1913, %v1915
      %v1932 = vadd.f32 %v1916, %v1917
      %1933 = vadd.xlane.f32.xlu0 %v1932
      %v1934 = vpop.xlane.xlu0 %1933
      %v1935 = vadd.f32 %v1918, %v1919
      %1936 = vadd.xlane.f32.xlu0 %v1935
      %v1937 = vpop.xlane.xlu0 %1936
      %v1938 = vadd.f32 %v1920, %v1921
      %1939 = vadd.xlane.f32.xlu0 %v1938
      %v1940 = vpop.xlane.xlu0 %1939
      %v1941 = vadd.f32 %v1922, %v1923
      %1942 = vadd.xlane.f32.xlu0 %v1941
      %v1943 = vpop.xlane.xlu0 %1942
      %v1944 = vmul.f32 %v1934, 0.00390625
      %v1945 = vmul.f32 %v1937, 0.00390625
      %v1946 = vmul.f32 %v1940, 0.00390625
      %v1947 = vmul.f32 %v1943, 0.00390625
      %v1948 = vld [vmem:[%s6] sm:$0xff]
      %v1949 = vld [vmem:[%s6 + $0x8] sm:$0xff]
      %v1950 = vld [vmem:[%s6 + $0x10] sm:$0xff]
      %v1951 = vld [vmem:[%s6 + $0x18] sm:$0xff]
      %v1952 = vmul.f32 %v1948, %v1944
      %v1953 = vmul.f32 %v1949, %v1945
      %v1954 = vmul.f32 %v1950, %v1946
      %v1955 = vmul.f32 %v1951, %v1947
      %vm1956 = vcmask 64512
      %v1957 = vsel %vm1956, %v1952, 0.0
      %v1958 = vsel %vm1956, %v1953, 0.0
      %v1959 = vadd.f32 %v1957, %v1958
      %v1960 = vsel %vm1956, %v1954, 0.0
      %v1961 = vadd.f32 %v1959, %v1960
      %v1962 = vsel %vm1956, %v1955, 0.0
      %v1963 = vadd.f32 %v1961, %v1962
      %v1964 = vrot.slane %v1963, 4
      %v1965 = vadd.f32 %v1963, %v1964
      %v1966 = vrot.slane %v1965, 2
      %v1967 = vadd.f32 %v1965, %v1966
      %v1968 = vrot.slane %v1967, 1
      %v1969 = vadd.f32 %v1967, %v1968
      %v1970 = vld [vmem:[%s7] sm:$0x1]
      %v1971 = vadd.f32 %v1969, %v1970
      %v1972 = vmax.f32 %v1971, 0.0
      %v1973 = vld [vmem:[%s8] sm:$0xff]
      %v1974 = vld [vmem:[%s8 + $0x8] sm:$0xff]
      %v1975 = vld [vmem:[%s8 + $0x10] sm:$0xff]
      %v1976 = vld [vmem:[%s8 + $0x18] sm:$0xff]
      %v1977 = vlaneseq
      %v1978 = vshrl.u32 %v1977, 7
      %v1979 = vsub.s32 0, %v1978
      %v1980 = vrot.slane %v1972, %v1979
      %v1981 = vmul.f32 %v1973, %v1980
      %v1982 = vmul.f32 %v1974, %v1980
      %v1983 = vmul.f32 %v1975, %v1980
      %v1984 = vmul.f32 %v1976, %v1980
      %v1985 = vsel %vm1956, %v1981, 0.0
      %1986 = vadd.xlane.f32.xlu0 %v1985
      %v1987 = vpop.xlane.xlu0 %1986
      %v1988 = vsel %vm1956, %v1982, 0.0
      %1989 = vadd.xlane.f32.xlu0 %v1988
      %v1990 = vpop.xlane.xlu0 %1989
      %v1991 = vsel %vm1956, %v1983, 0.0
      %1992 = vadd.xlane.f32.xlu0 %v1991
      %v1993 = vpop.xlane.xlu0 %1992
      %v1994 = vsel %vm1956, %v1984, 0.0
      %1995 = vadd.xlane.f32.xlu0 %v1994
      %v1996 = vpop.xlane.xlu0 %1995
      %v1997 = vld [vmem:[%s9] sm:$0xff]
      %v1998 = vld [vmem:[%s9 + $0x8] sm:$0xff]
      %v1999 = vld [vmem:[%s9 + $0x10] sm:$0xff]
      %v2000 = vld [vmem:[%s9 + $0x18] sm:$0xff]
      %v2001 = vadd.f32 %v1987, %v1997
      %v2002 = vadd.f32 %v1990, %v1998
      %v2003 = vadd.f32 %v1993, %v1999
      %v2004 = vadd.f32 %v1996, %v2000
      %v2005 = vmul.f32 %v2001, 0.16666667
      %v2006 = vmul.f32 %v2002, 0.16666667
      %v2007 = vmul.f32 %v2003, 0.16666667
      %v2008 = vmul.f32 %v2004, 0.16666667
      %v2009 = vadd.f32 %v2005, 0.5
      %v2010 = vadd.f32 %v2006, 0.5
      %v2011 = vadd.f32 %v2007, 0.5
      %v2012 = vadd.f32 %v2008, 0.5
      %v2013 = vmax.f32 %v2009, 0.0
      %v2014 = vmax.f32 %v2010, 0.0
      %v2015 = vmax.f32 %v2011, 0.0
      %v2016 = vmax.f32 %v2012, 0.0
      %v2017 = vmin.f32 %v2013, 1.0
      %v2018 = vmin.f32 %v2014, 1.0
      %v2019 = vmin.f32 %v2015, 1.0
      %v2020 = vmin.f32 %v2016, 1.0
      %2022 = vset.pattern.permute.xlu0 0
      %2023 = vperm.xlu0 %2022, %v2017
      %v2024 = vpop.permute.xlu0 %2023
      %2027 = vset.pattern.permute.xlu0 0
      %2028 = vperm.xlu0 %2027, %v2018
      %v2029 = vpop.permute.xlu0 %2028
      %2032 = vset.pattern.permute.xlu0 0
      %2033 = vperm.xlu0 %2032, %v2019
      %v2034 = vpop.permute.xlu0 %2033
      %2037 = vset.pattern.permute.xlu0 0
      %2038 = vperm.xlu0 %2037, %v2020
      %v2039 = vpop.permute.xlu0 %2038
      %v2041 = vmul.f32 %v1868, %v2024
      %v2042 = vmul.f32 %v1869, %v2024
      %v2043 = vmul.f32 %v1870, %v2024
      %v2044 = vmul.f32 %v1871, %v2029
      %v2045 = vmul.f32 %v1872, %v2029
      %v2046 = vmul.f32 %v1873, %v2029
      %v2047 = vmul.f32 %v1874, %v2034
      %v2048 = vmul.f32 %v1875, %v2034
      %v2049 = vmul.f32 %v1876, %v2034
      %v2050 = vmul.f32 %v1877, %v2039
      %v2051 = vmul.f32 %v1878, %v2039
      %v2052 = vmul.f32 %v1879, %v2039
      %v2053 = vld [vmem:[%s10] sm:$0xff]
      %v2054 = vld [vmem:[%s10 + $0x8] sm:$0xff]
      %v2055 = vld [vmem:[%s11] sm:$0xff]
      %v2056 = vld [vmem:[%s11 + $0x8] sm:$0xff]
      %2058 = vset.pattern.permute.xlu0 0
      %2059 = vperm.xlu0 %2058, %v2055
      %v2060 = vpop.permute.xlu0 %2059
      %2063 = vset.pattern.permute.xlu0 0
      %2064 = vperm.xlu0 %2063, %v2056
      %v2065 = vpop.permute.xlu0 %2064
      %2079 = vrot.lane.b32.xlu0 %v2041, 17
      %v2080 = vpop.permute.xlu0 %2079
      %2081 = vrot.lane.b32.xlu0 %v2042, 17
      %v2082 = vpop.permute.xlu0 %2081
      %2083 = vrot.lane.b32.xlu0 %v2043, 17
      %v2084 = vpop.permute.xlu0 %2083
      %2085 = vrot.lane.b32.xlu0 %v2044, 17
      %v2086 = vpop.permute.xlu0 %2085
      %2087 = vrot.lane.b32.xlu0 %v2045, 17
      %v2088 = vpop.permute.xlu0 %2087
      %2089 = vrot.lane.b32.xlu0 %v2046, 17
      %v2090 = vpop.permute.xlu0 %2089
      %2091 = vrot.lane.b32.xlu0 %v2047, 17
      %v2092 = vpop.permute.xlu0 %2091
      %2093 = vrot.lane.b32.xlu0 %v2048, 17
      %v2094 = vpop.permute.xlu0 %2093
      %2095 = vrot.lane.b32.xlu0 %v2049, 17
      %v2096 = vpop.permute.xlu0 %2095
      %2097 = vrot.lane.b32.xlu0 %v2050, 17
      %v2098 = vpop.permute.xlu0 %2097
      %2099 = vrot.lane.b32.xlu0 %v2051, 17
      %v2100 = vpop.permute.xlu0 %2099
      %2101 = vrot.lane.b32.xlu0 %v2052, 17
      %v2102 = vpop.permute.xlu0 %2101
      %v2103 = vsel %vm1661, %v2080, %v2082
      %v2104 = vsel %vm1661, %v2082, %v2084
      %v2105 = vsel %vm1661, %v2086, %v2088
      %v2106 = vsel %vm1661, %v2088, %v2090
      %v2107 = vsel %vm1661, %v2092, %v2094
      %v2108 = vsel %vm1661, %v2094, %v2096
      %v2109 = vsel %vm1661, %v2098, %v2100
      %v2110 = vsel %vm1661, %v2100, %v2102
      %vm2119 = vcmask 261120
      %v2121 = vsel %vm2119, %v2053, 0
      %v2124 = vsel %vm2119, %v2054, 0
      %2126 = vmatprep.subr.mxu0 %v2104
      %2127 = vmatpush1.msra.mxu0 %v2103
      %2128 = vmatprep.subr.mxu0 %v2106
      %2129 = vmatpush1.msra.mxu0 %v2105
      %2130 = vmatprep.subr.mxu0 %v2108
      %2131 = vmatpush1.msra.mxu0 %v2107
      %2132 = vmatprep.subr.mxu0 %v2110
      %2133 = vmatpush1.msra.mxu0 %v2109
      %2134 = vmatprep.subr.mxu0 0.0
      %2135 = vmatpush1.msra.mxu0 0.0
      %2136 = vmatprep.subr.mxu0 0.0
      %2137 = vmatpush1.msra.mxu0 0.0
      %2138 = vmatprep.subr.mxu0 0.0
      %2139 = vmatpush1.msra.mxu0 0.0
      %2140 = vmatprep.subr.mxu0 0.0
      %2141 = vmatpush1.msra.mxu0 0.0
      %2142 = vmatprep.subr.mxu0 0.0
      %2143 = vmatpush1.msra.mxu0 0.0
      %2144 = vmatprep.subr.mxu0 0.0
      %2145 = vmatpush1.msra.mxu0 0.0
      %2146 = vmatprep.subr.mxu0 0.0
      %2147 = vmatpush1.msra.mxu0 0.0
      %2148 = vmatprep.subr.mxu0 0.0
      %2149 = vmatpush1.msra.mxu0 0.0
      %2150 = vmatprep.subr.mxu0 0.0
      %2151 = vmatpush1.msra.mxu0 0.0
      %2152 = vmatprep.subr.mxu0 0.0
      %2153 = vmatpush1.msra.mxu0 0.0
      %2154 = vmatprep.subr.mxu0 0.0
      %2155 = vmatpush1.msra.mxu0 0.0
      %2156 = vmatprep.subr.mxu0 0.0
      %2157 = vmatpush1.msra.mxu0 0.0
      %2158 = vmatprep.subr.mxu0 0.0
      %2159 = vmatpush1.msra.mxu0 0.0
      %2160 = vmatprep.subr.mxu0 0.0
      %2161 = vmatpush1.msra.mxu0 0.0
      %2162 = vmatprep.subr.mxu0 0.0
      %2163 = vmatpush1.msra.mxu0 0.0
      %2164 = vmatprep.subr.mxu0 0.0
      %2165 = vmatpush1.msra.mxu0 0.0
      %2166 = vmatprep.subr.mxu0 0.0
      %2167 = vmatpush1.msra.mxu0 0.0
      %2168 = vmatprep.subr.mxu0 0.0
      %2169 = vmatpush1.msra.mxu0 0.0
      %2170 = vmatprep.subr.mxu0 0.0
      %2171 = vmatpush1.msra.mxu0 0.0
      %2172 = vmatprep.subr.mxu0 0.0
      %2173 = vmatpush1.msra.mxu0 0.0
      %2174 = vmatprep.subr.mxu0 0.0
      %2175 = vmatpush1.msra.mxu0 0.0
      %2176 = vmatprep.subr.mxu0 0.0
      %2177 = vmatpush1.msra.mxu0 0.0
      %2178 = vmatprep.subr.mxu0 0.0
      %2179 = vmatpush1.msra.mxu0 0.0
      %2180 = vmatprep.subr.mxu0 0.0
      %2181 = vmatpush1.msra.mxu0 0.0
      %2182 = vmatprep.subr.mxu0 0.0
      %2183 = vmatpush1.msra.mxu0 0.0
      %2184 = vmatprep.subr.mxu0 0.0
      %2185 = vmatpush1.msra.mxu0 0.0
      %2186 = vmatprep.subr.mxu0 0.0
      %2187 = vmatpush1.msra.mxu0 0.0
      %2188 = vmatprep.subr.mxu0 0.0
      %2189 = vmatpush1.msra.mxu0 0.0
      %2190 = vmatprep.mubr.f32.mxu0 0.0
      %2191 = vmatmul.mubr.f32.gmra.mrb[0].mxu0 %v2121
      %v2192 = vpop.f32.mrb[0].mxu0
      %v2193 = vadd.f32 %v2060, %v2192
      %v2194 = vpop.f32.mrb[0].mxu0
      %v2195 = vadd.f32 %v2060, %v2194
      %2196 = vmatprep.mubr.f32.mxu0 0.0
      %2197 = vmatmul.mubr.f32.gmra.mrb[0].mxu0 %v2124
      %v2198 = vpop.f32.mrb[0].mxu0
      %v2199 = vadd.f32 %v2065, %v2198
      %v2200 = vpop.f32.mrb[0].mxu0
      %v2201 = vadd.f32 %v2065, %v2200
      %2202 = vdwg.mxu0
      %v2203 = vadd.f32 %v2193, %v414
      %v2204 = vadd.f32 %v2195, %v415
      %v2205 = vadd.f32 %v2199, %v416
      %v2206 = vadd.f32 %v2201, %v417
      %2207 = vst [vmem:[%s413] sm:$0xff] %v2203
      %2208 = vst [vmem:[%s413 + $0x8] sm:$0xff] %v2204
      %2209 = vst [vmem:[%s413 + $0x10] sm:$0xff] %v2205
      %2210 = vst [vmem:[%s413 + $0x18] sm:$0xff] %v2206
      %p2211 = scmp.lt.s32.totalorder %s23, 1
      %s2212 = scalar_select %p2211, %s23, 1
      %s2213 = smul.addr %s2212, 4
      %s2214 = smul.addr %s2213, 8
      %s2215 = scalar_lea.vmem %s12, %s2214
      // Predicated region
      $region69: #{inverted_residual_forward.1} parent=67 // pred_check
        %p2216 = pneg %p298
      $region70: #{inverted_residual_forward.1} parent=67 // pred_check_branch
        %2218 = sbr.rel (%p2216) target = $region72
      $region71: #{inverted_residual_forward.1} parent=67 // pred_region
        _
      $region72: #{inverted_residual_forward.1} parent=67 // pred_fallthru
        _
    $region68: #{inverted_residual_forward.1} parent=5 // pred_fallthru
      _
    %p2219 = scmp.le.s32.totalorder 2, %s18
    // Predicated region
    $region73: #{inverted_residual_forward.1} parent=5 // pred_check
      %p2220 = pneg %p2219
    $region74: #{inverted_residual_forward.1} parent=5 // pred_check_branch
      %2222 = sbr.rel (%p2220) target = $region76
    $region75: #{inverted_residual_forward.1} parent=5 // pred_region
      %s2223 = ssub.s32 %s18, 2
      // Predicated region
      $region77: #{inverted_residual_forward.1} parent=75 // pred_check
        %p2224 = pneg %p304
      $region78: #{inverted_residual_forward.1} parent=75 // pred_check_branch
        %2226 = sbr.rel (%p2224) target = $region80
      $region79: #{inverted_residual_forward.1} parent=75 // pred_region
        %p2227 = scmp.lt.s32.totalorder %s24, 1
        %s2228 = scalar_select %p2227, %s24, 1
        %s2229 = smul.addr %s2228, 4
        %s2230 = smul.addr %s2229, 8
        %s2231 = scalar_lea.vmem %s12, %s2230
      $region80: #{inverted_residual_forward.1} parent=75 // pred_fallthru
        _
    $region76: #{inverted_residual_forward.1} parent=5 // pred_fallthru
      _
  $region6: #{inverted_residual_forward.1} parent=0 // loop_footer
    %s22 = sadd.s32 1, %s18
  $region7: #{inverted_residual_forward.1} parent=0 // loop_footer_branch
    %17 = sbr.rel target = $region3
  $region8: #{inverted_residual_forward.1} parent=0 // loop_exit
    _

</llo_original>
